<compile_context>
chip_gen: v7x
topology: tpu7x:2x2x1
jax: 0.10.0
libtpu: 0.0.40
codegen_flags: <defaults>
</compile_context>

<pallas_src>
import functools

import jax
import jax.numpy as jnp
from jax.experimental import pallas as pl
from jax.experimental.pallas import tpu as pltpu


# --------------------------------------------------------------------------
# Kernels
# --------------------------------------------------------------------------
def _frm_tiled_kernel(x1_ref, x2_ref, ygate_ref,
                      w1a_ref, w1b_ref, b1_ref, w2_ref, b2_ref,
                      out1_ref, out2_ref,
                      *, lambda_s, compute_dtype):
    """Spatial 1x1-conv gate + gated residual for one (batch, hw-tile) block.

    Channel gate (pre-scaled by lambda_c) arrives as the tiny ygate input.
    """
    x1 = x1_ref[0]                       # (C, T) f32
    x2 = x2_ref[0]                       # (C, T) f32

    # spatial path: 1x1 conv -> ReLU -> 1x1 conv -> sigmoid
    # (the (2C, T) channel concat is eliminated: w_sp1 is pre-split in the
    #  wrapper into its x1 / x2 column halves, already in compute_dtype)
    a = x1.astype(compute_dtype)
    b = x2.astype(compute_dtype)
    hid = (jnp.dot(w1a_ref[...], a, preferred_element_type=jnp.float32)
           + jnp.dot(w1b_ref[...], b, preferred_element_type=jnp.float32)
           + b1_ref[...])
    hid = jnp.maximum(hid, 0.0)                              # (C_hid, T) f32
    s = jnp.dot(w2_ref[...], hid.astype(compute_dtype),
                preferred_element_type=jnp.float32) + b2_ref[...]
    s = jax.nn.sigmoid(s)                                    # (2, T) f32

    # combine channel + spatial gates first, then one mul-add per output
    ygate = ygate_ref[0]                 # (C, 2), already scaled by lambda_c
    gate1 = ygate[:, 0:1] + lambda_s * s[1:2, :]   # gates x2 -> out1
    gate2 = ygate[:, 1:2] + lambda_s * s[0:1, :]   # gates x1 -> out2

    out1_ref[0] = x1 + x2 * gate1
    out2_ref[0] = x2 + x1 * gate2


def _frm_fused_kernel(x1_ref, x2_ref,
                      w1a_ref, w1b_ref, b1_ref, w2_ref, b2_ref,
                      wm1a_ref, wm1b_ref, wm1c_ref, wm1d_ref, bm1_ref,
                      wm2a_ref, wm2b_ref, bm2a_ref, bm2b_ref,
                      out1_ref, out2_ref,
                      *, lambda_c, lambda_s, compute_dtype):
    """Single-pass per-batch kernel: pooling + channel MLP + spatial conv +
    gated residual, all on the resident (C, HW) slabs (4 HBM passes total)."""
    x1 = x1_ref[0]                       # (C, HW) f32
    x2 = x2_ref[0]                       # (C, HW) f32

    # ---- channel branch (kept f32; tiny — VPU multiplies + XLU reductions) ----
    avg1 = jnp.mean(x1, axis=1, keepdims=True)               # (C, 1)
    avg2 = jnp.mean(x2, axis=1, keepdims=True)
    mx1 = jnp.max(x1, axis=1, keepdims=True)
    mx2 = jnp.max(x2, axis=1, keepdims=True)
    # first MLP layer: w_mlp1 was pre-transposed & column-split in the wrapper
    h = (jnp.sum(wm1a_ref[...] * avg1, axis=0, keepdims=True)
         + jnp.sum(wm1b_ref[...] * avg2, axis=0, keepdims=True)
         + jnp.sum(wm1c_ref[...] * mx1, axis=0, keepdims=True)
         + jnp.sum(wm1d_ref[...] * mx2, axis=0, keepdims=True)
         + bm1_ref[...])                                      # (1, m_hid)
    h = jnp.maximum(h, 0.0)
    # second MLP layer split into its two C-row halves -> (C, 1) gate columns
    y0 = jax.nn.sigmoid(jnp.sum(wm2a_ref[...] * h, axis=1, keepdims=True)
                        + bm2a_ref[...])                      # gates x1 -> out2
    y1 = jax.nn.sigmoid(jnp.sum(wm2b_ref[...] * h, axis=1, keepdims=True)
                        + bm2b_ref[...])                      # gates x2 -> out1

    # ---- spatial branch (MXU, compute_dtype inputs, f32 accumulation) ----
    a = x1.astype(compute_dtype)
    b = x2.astype(compute_dtype)
    hid = (jnp.dot(w1a_ref[...], a, preferred_element_type=jnp.float32)
           + jnp.dot(w1b_ref[...], b, preferred_element_type=jnp.float32)
           + b1_ref[...])
    hid = jnp.maximum(hid, 0.0)
    s = jnp.dot(w2_ref[...], hid.astype(compute_dtype),
                preferred_element_type=jnp.float32) + b2_ref[...]
    s = jax.nn.sigmoid(s)                                     # (2, HW)

    gate1 = lambda_c * y1 + lambda_s * s[1:2, :]
    gate2 = lambda_c * y0 + lambda_s * s[0:1, :]
    out1_ref[0] = x1 + x2 * gate1
    out2_ref[0] = x2 + x1 * gate2


# --------------------------------------------------------------------------
# Sizing helpers (generation aware)
# --------------------------------------------------------------------------
def _tpu_info():
    """(physical VMEM bytes, lane alignment for hw tiles) for the local chip."""
    vmem_bytes = 128 << 20
    lane_align = 256            # MXU N-width on v6e/v7x (2x256^2)
    try:
        info = pltpu.get_tpu_info()
        vmem_bytes = int(getattr(info, "vmem_capacity_bytes", vmem_bytes))
    except Exception:
        pass
    try:
        kind = jax.devices()[0].device_kind.lower()
        if any(t in kind for t in ("v2", "v3", "v4", "v5")):
            lane_align = 128    # 128-wide MXU generations
    except Exception:
        pass
    return vmem_bytes, lane_align


def _per_lane_bytes(c, c_hid, compute_itemsize):
    """Approx VMEM bytes per hw lane: x1/x2/out1/out2 f32 double-buffered,
    compute-dtype copies of x1/x2, f32 gate temporaries, hid (+its cast)."""
    return (c * (32 + 2 * compute_itemsize + 8)
            + max(c_hid, 8) * (4 + compute_itemsize) + 64)


def _pick_hw_tile(hw_p, per_lane, lane_align, vmem_bytes):
    """Largest lane-aligned tile dividing the (padded) HW within the budget."""
    budget = (3 * vmem_bytes) // 8          # ~24 MiB on v7x, ~48 MiB v5e/v6e
    cap = (budget // per_lane) // lane_align * lane_align
    cap = max(lane_align, min(8192, cap))
    t = min(hw_p, cap)
    t = max(lane_align, (t // lane_align) * lane_align)
    while hw_p % t:
        t -= lane_align
    return t


# --------------------------------------------------------------------------
# Wrapper
# --------------------------------------------------------------------------
def feature_rectify(x1, x2, params, *, lambda_c=0.5, lambda_s=0.5,
                    hw_tile=None, compute_dtype=jnp.bfloat16, force_path=None):
    """x1, x2: (B, C, H, W) float32. Returns (out1, out2) with the same shape."""
    assert force_path in (None, "fused", "tiled")
    (w_sp1, b_sp1, w_sp2, b_sp2, w_mlp1, b_mlp1, w_mlp2, b_mlp2) = params
    B, C, H, W = x1.shape
    HW = H * W
    c_hid = w_sp1.shape[0]
    x1f = x1.reshape(B, C, HW)
    x2f = x2.reshape(B, C, HW)

    vmem_bytes, lane_align = _tpu_info()
    itemsize_c = jnp.dtype(compute_dtype).itemsize
    per_lane = _per_lane_bytes(C, c_hid, itemsize_c)
    sp_w_bytes = 2 * (w_sp1.size + w_sp2.size) * itemsize_c      # double-buffered
    mlp_w_bytes = 2 * (w_mlp1.size + w_mlp2.size) * 4
    budget = (3 * vmem_bytes) // 8
    vmem_clamp = (48 << 20) if vmem_bytes <= (64 << 20) else (96 << 20)

    # Pre-cast the split spatial-conv weights ONCE (no per-step cast in-kernel).
    cw1a = w_sp1[:, :C].astype(compute_dtype)
    cw1b = w_sp1[:, C:].astype(compute_dtype)
    cw2 = w_sp2.astype(compute_dtype)

    fused_est = per_lane * HW + sp_w_bytes + mlp_w_bytes + (2 << 20)
    if force_path == "fused":
        use_fused = True
    elif force_path == "tiled":
        use_fused = False
    else:
        use_fused = (hw_tile is None) and (fused_est <= budget)

    # ---------------- fused single-pass path (grid over batch only) ----------
    if use_fused:
        if fused_est > vmem_clamp:
            raise ValueError(
                f"fused path needs ~{fused_est >> 20} MiB VMEM, over the "
                f"{vmem_clamp >> 20} MiB budget for this chip; use the tiled path")
        wm1t = w_mlp1.T                                       # (4C, m_hid)
        wm1a, wm1b = wm1t[:C], wm1t[C:2 * C]                  # avg(x1), avg(x2)
        wm1c, wm1d = wm1t[2 * C:3 * C], wm1t[3 * C:]          # max(x1), max(x2)
        bm1_row = b_mlp1.reshape(1, -1)                       # (1, m_hid)
        wm2a, wm2b = w_mlp2[:C], w_mlp2[C:]                   # (C, m_hid) each
        bm2a, bm2b = b_mlp2[:C], b_mlp2[C:]                   # (C, 1) each

        vmem_limit = int(min(max(fused_est + (2 << 20), 16 << 20), vmem_clamp))

        def xspec():
            return pl.BlockSpec((1, C, HW), lambda bb: (bb, 0, 0))

        def wspec(a):
            nd = a.ndim
            return pl.BlockSpec(a.shape, lambda bb: (0,) * nd)

        kernel = functools.partial(_frm_fused_kernel, lambda_c=lambda_c,
                                   lambda_s=lambda_s, compute_dtype=compute_dtype)
        out1, out2 = pl.pallas_call(
            kernel,
            out_shape=(jax.ShapeDtypeStruct((B, C, HW), jnp.float32),
                       jax.ShapeDtypeStruct((B, C, HW), jnp.float32)),
            grid_spec=pltpu.PrefetchScalarGridSpec(
                num_scalar_prefetch=0,
                grid=(B,),
                in_specs=[xspec(), xspec(),
                          wspec(cw1a), wspec(cw1b), wspec(b_sp1),
                          wspec(cw2), wspec(b_sp2),
                          wspec(wm1a), wspec(wm1b), wspec(wm1c), wspec(wm1d),
                          wspec(bm1_row),
                          wspec(wm2a), wspec(wm2b), wspec(bm2a), wspec(bm2b)],
                out_specs=[xspec(), xspec()],
            ),
            compiler_params=pltpu.CompilerParams(
                dimension_semantics=("parallel",),
                vmem_limit_bytes=vmem_limit),
        )(x1f, x2f, cw1a, cw1b, b_sp1, cw2, b_sp2,
          wm1a, wm1b, wm1c, wm1d, bm1_row, wm2a, wm2b, bm2a, bm2b)
        return out1.reshape(B, C, H, W), out2.reshape(B, C, H, W)

    # ---------------- tiled path (channel branch hoisted to XLA) -------------
    # channel branch on the UNPADDED slabs (exact mean/max), pre-scaled by lc
    avg1 = jnp.mean(x1f, axis=2)
    avg2 = jnp.mean(x2f, axis=2)
    mx1 = jnp.max(x1f, axis=2)
    mx2 = jnp.max(x2f, axis=2)
    pooled = jnp.concatenate([avg1, avg2, mx1, mx2], axis=1)          # (B, 4C)
    h = jnp.maximum(pooled @ w_mlp1.T + b_mlp1[:, 0], 0.0)
    y = jax.nn.sigmoid(h @ w_mlp2.T + b_mlp2[:, 0])                   # (B, 2C)
    y_gate = lambda_c * jnp.stack([y[:, C:], y[:, :C]], axis=2)       # (B, C, 2)

    if hw_tile is None:
        hw_p = -(-HW // lane_align) * lane_align
        hw_tile = _pick_hw_tile(hw_p, per_lane, lane_align, vmem_bytes)
    else:
        assert hw_tile % 128 == 0, "hw_tile must be a multiple of 128"
        hw_p = -(-HW // hw_tile) * hw_tile
        est = per_lane * hw_tile + sp_w_bytes + (2 << 20)
        if est > vmem_clamp:
            raise ValueError(
                f"hw_tile={hw_tile} needs ~{est >> 20} MiB VMEM, over the "
                f"{vmem_clamp >> 20} MiB budget for this chip")
    n_t = hw_p // hw_tile

    # pad HW so every block is lane-dense; pad columns produce zeros in the
    # residual epilogue and are sliced off below (pooling already done unpadded)
    if hw_p != HW:
        pad = ((0, 0), (0, 0), (0, hw_p - HW))
        x1k = jnp.pad(x1f, pad)
        x2k = jnp.pad(x2f, pad)
    else:
        x1k, x2k = x1f, x2f

    vmem_limit = int(min(max(per_lane * hw_tile + sp_w_bytes + (4 << 20),
                             16 << 20), vmem_clamp))

    # megacore: put an even / larger extent first so 2 TCs split it evenly
    swap = (n_t >= 2) and (B == 1 or (B % 2 == 1 and n_t % 2 == 0))
    if swap:
        grid = (n_t, B)
        x_map = lambda tt, bb: (bb, 0, tt)
        g_map = lambda tt, bb: (bb, 0, 0)
        w_map = lambda nd: (lambda tt, bb: (0,) * nd)
    else:
        grid = (B, n_t)
        x_map = lambda bb, tt: (bb, 0, tt)
        g_map = lambda bb, tt: (bb, 0, 0)
        w_map = lambda nd: (lambda bb, tt: (0,) * nd)

    def xspec():
        return pl.BlockSpec((1, C, hw_tile), x_map)

    def wspec(a):
        return pl.BlockSpec(a.shape, w_map(a.ndim))

    kernel = functools.partial(_frm_tiled_kernel, lambda_s=lambda_s,
                               compute_dtype=compute_dtype)
    out1, out2 = pl.pallas_call(
        kernel,
        out_shape=(jax.ShapeDtypeStruct((B, C, hw_p), jnp.float32),
                   jax.ShapeDtypeStruct((B, C, hw_p), jnp.float32)),
        grid_spec=pltpu.PrefetchScalarGridSpec(
            num_scalar_prefetch=0,
            grid=grid,
            in_specs=[xspec(), xspec(),
                      pl.BlockSpec((1, C, 2), g_map),
                      wspec(cw1a), wspec(cw1b), wspec(b_sp1),
                      wspec(cw2), wspec(b_sp2)],
            out_specs=[xspec(), xspec()],
        ),
        compiler_params=pltpu.CompilerParams(
            dimension_semantics=("parallel",) * len(grid),
            vmem_limit_bytes=vmem_limit),
    )(x1k, x2k, y_gate, cw1a, cw1b, b_sp1, cw2, b_sp2)

    out1 = out1[:, :, :HW].reshape(B, C, H, W)
    out2 = out2[:, :, :HW].reshape(B, C, H, W)
    return out1, out2


# --------------------------------------------------------------------------
# Parameters + pure-JAX reference
# --------------------------------------------------------------------------
def make_params(dim, reduction=1, key=jax.random.PRNGKey(0)):
    """Synthetic parameters matching the PyTorch module shapes.

    spatial_conv: Conv2d(2*dim, dim//reduction, 1), Conv2d(dim//reduction, 2, 1)
    channel_mlp : Linear(4*dim, 2*dim//reduction), Linear(2*dim//reduction, 2*dim)
    Weights are (out_features, in_features); biases are (out_features, 1).
    """
    ks = jax.random.split(key, 8)
    c_hid = dim // reduction
    m_hid = 2 * dim // reduction
    sc = 0.1
    w_sp1 = sc * jax.random.normal(ks[0], (c_hid, 2 * dim), jnp.float32)
    b_sp1 = sc * jax.random.normal(ks[1], (c_hid, 1), jnp.float32)
    w_sp2 = sc * jax.random.normal(ks[2], (2, c_hid), jnp.float32)
    b_sp2 = sc * jax.random.normal(ks[3], (2, 1), jnp.float32)
    w_mlp1 = sc * jax.random.normal(ks[4], (m_hid, 4 * dim), jnp.float32)
    b_mlp1 = sc * jax.random.normal(ks[5], (m_hid, 1), jnp.float32)
    w_mlp2 = sc * jax.random.normal(ks[6], (2 * dim, m_hid), jnp.float32)
    b_mlp2 = sc * jax.random.normal(ks[7], (2 * dim, 1), jnp.float32)
    return (w_sp1, b_sp1, w_sp2, b_sp2, w_mlp1, b_mlp1, w_mlp2, b_mlp2)


def feature_rectify_ref(x1, x2, params, *, lambda_c=0.5, lambda_s=0.5):
    """Pure-JAX reference mirroring the PyTorch forward pass."""
    (w_sp1, b_sp1, w_sp2, b_sp2, w_mlp1, b_mlp1, w_mlp2, b_mlp2) = params
    B, C, H, W = x1.shape
    concat = jnp.concatenate([x1, x2], axis=1)               # (B, 2C, H, W)
    cc = concat.reshape(B, 2 * C, H * W)

    hid = jnp.maximum(jnp.einsum("oc,bcp->bop", w_sp1, cc) + b_sp1[None], 0.0)
    spatial = jax.nn.sigmoid(jnp.einsum("oc,bcp->bop", w_sp2, hid) + b_sp2[None])
    spatial = spatial.reshape(B, 2, 1, H, W).transpose(1, 0, 2, 3, 4)

    avg = cc.mean(axis=2)
    mx = cc.max(axis=2)
    pooled = jnp.concatenate([avg, mx], axis=1)              # (B, 4C)
    h = jnp.maximum(pooled @ w_mlp1.T + b_mlp1[:, 0], 0.0)
    y = jax.nn.sigmoid(h @ w_mlp2.T + b_mlp2[:, 0])          # (B, 2C)
    y = y.reshape(B, 2, C, 1, 1).transpose(1, 0, 2, 3, 4)

    out1 = x1 + lambda_c * y[1] * x2 + lambda_s * spatial[1] * x2
    out2 = x2 + lambda_c * y[0] * x1 + lambda_s * spatial[0] * x1
    return out1, out2


# --------------------------------------------------------------------------
# Self-test
# --------------------------------------------------------------------------
if __name__ == "__main__":
    B, C, H, W = 2, 4, 16, 16
    key = jax.random.PRNGKey(0)
    k1, k2, kp = jax.random.split(key, 3)
    x1 = jax.random.normal(k1, (B, C, H, W), jnp.float32)
    x2 = jax.random.normal(k2, (B, C, H, W), jnp.float32)
    params = make_params(C, reduction=1, key=kp)
    ref1, ref2 = feature_rectify_ref(x1, x2, params)

    # 1) fused single-pass kernel, f32 MXU path (tight tolerance)
    o1, o2 = feature_rectify(x1, x2, params, compute_dtype=jnp.float32,
                             force_path="fused")
    jax.block_until_ready((o1, o2))
    assert jnp.allclose(o1, ref1, atol=1e-5, rtol=1e-5)
    assert jnp.allclose(o2, ref2, atol=1e-5, rtol=1e-5)

    # 2) tiled kernel with a multi-tile HW grid axis, f32
    o1, o2 = feature_rectify(x1, x2, params, compute_dtype=jnp.float32,
                             force_path="tiled", hw_tile=128)
    jax.block_until_ready((o1, o2))
    assert jnp.allclose(o1, ref1, atol=1e-5, rtol=1e-5)
    assert jnp.allclose(o2, ref2, atol=1e-5, rtol=1e-5)

    # 3) tiled kernel with a non-128-multiple spatial size (exercises padding)
    Hp, Wp = 10, 10
    x1p = jax.random.normal(jax.random.PRNGKey(1), (B, C, Hp, Wp), jnp.float32)
    x2p = jax.random.normal(jax.random.PRNGKey(2), (B, C, Hp, Wp), jnp.float32)
    rp1, rp2 = feature_rectify_ref(x1p, x2p, params)
    op1, op2 = feature_rectify(x1p, x2p, params, compute_dtype=jnp.float32,
                               force_path="tiled")
    jax.block_until_ready((op1, op2))
    assert jnp.allclose(op1, rp1, atol=1e-5, rtol=1e-5)
    assert jnp.allclose(op2, rp2, atol=1e-5, rtol=1e-5)

    # 4) default config: auto path selection (fused here) + bf16 MXU compute
    o1b, o2b = feature_rectify(x1, x2, params)
    jax.block_until_ready((o1b, o2b))
    assert jnp.allclose(o1b, ref1, atol=3e-2, rtol=3e-2)
    assert jnp.allclose(o2b, ref2, atol=3e-2, rtol=3e-2)

    print("KERNEL_OK")
</pallas_src>

<mosaic_0001>
module attributes {stable_mosaic.version = 11 : i64} {
  func.func @_frm_fused_kernel(%arg0: i32, %arg1: memref<1x4x256xf32, #tpu.memory_space<vmem>>, %arg2: memref<1x4x256xf32, #tpu.memory_space<vmem>>, %arg3: memref<4x4xf32, #tpu.memory_space<vmem>>, %arg4: memref<4x4xf32, #tpu.memory_space<vmem>>, %arg5: memref<4x1xf32, #tpu.memory_space<vmem>>, %arg6: memref<2x4xf32, #tpu.memory_space<vmem>>, %arg7: memref<2x1xf32, #tpu.memory_space<vmem>>, %arg8: memref<4x8xf32, #tpu.memory_space<vmem>>, %arg9: memref<4x8xf32, #tpu.memory_space<vmem>>, %arg10: memref<4x8xf32, #tpu.memory_space<vmem>>, %arg11: memref<4x8xf32, #tpu.memory_space<vmem>>, %arg12: memref<1x8xf32, #tpu.memory_space<vmem>>, %arg13: memref<4x8xf32, #tpu.memory_space<vmem>>, %arg14: memref<4x8xf32, #tpu.memory_space<vmem>>, %arg15: memref<4x1xf32, #tpu.memory_space<vmem>>, %arg16: memref<4x1xf32, #tpu.memory_space<vmem>>, %arg17: memref<1x4x256xf32, #tpu.memory_space<vmem>>, %arg18: memref<1x4x256xf32, #tpu.memory_space<vmem>>) attributes {dimension_semantics = [#tpu.dimension_semantics<parallel>], iteration_bounds = array<i64: 2>, scalar_prefetch = 0 : i64, scratch_operands = 0 : i64, tpu.core_type = #tpu.core_type<tc>, window_params = [{transform_indices = @transform_0, window_bounds = array<i64: 1, 4, 256>}, {transform_indices = @transform_1, window_bounds = array<i64: 1, 4, 256>}, {pipeline_mode = #tpu.pipeline_mode<synchronous>, transform_indices = @transform_2, window_bounds = array<i64: 4, 4>}, {pipeline_mode = #tpu.pipeline_mode<synchronous>, transform_indices = @transform_3, window_bounds = array<i64: 4, 4>}, {pipeline_mode = #tpu.pipeline_mode<synchronous>, transform_indices = @transform_4, window_bounds = array<i64: 4, 1>}, {pipeline_mode = #tpu.pipeline_mode<synchronous>, transform_indices = @transform_5, window_bounds = array<i64: 2, 4>}, {pipeline_mode = #tpu.pipeline_mode<synchronous>, transform_indices = @transform_6, window_bounds = array<i64: 2, 1>}, {pipeline_mode = #tpu.pipeline_mode<synchronous>, transform_indices = @transform_7, window_bounds = array<i64: 4, 8>}, {pipeline_mode = #tpu.pipeline_mode<synchronous>, transform_indices = @transform_8, window_bounds = array<i64: 4, 8>}, {pipeline_mode = #tpu.pipeline_mode<synchronous>, transform_indices = @transform_9, window_bounds = array<i64: 4, 8>}, {pipeline_mode = #tpu.pipeline_mode<synchronous>, transform_indices = @transform_10, window_bounds = array<i64: 4, 8>}, {pipeline_mode = #tpu.pipeline_mode<synchronous>, transform_indices = @transform_11, window_bounds = array<i64: 1, 8>}, {pipeline_mode = #tpu.pipeline_mode<synchronous>, transform_indices = @transform_12, window_bounds = array<i64: 4, 8>}, {pipeline_mode = #tpu.pipeline_mode<synchronous>, transform_indices = @transform_13, window_bounds = array<i64: 4, 8>}, {pipeline_mode = #tpu.pipeline_mode<synchronous>, transform_indices = @transform_14, window_bounds = array<i64: 4, 1>}, {pipeline_mode = #tpu.pipeline_mode<synchronous>, transform_indices = @transform_15, window_bounds = array<i64: 4, 1>}, {transform_indices = @transform_16, window_bounds = array<i64: 1, 4, 256>}, {transform_indices = @transform_17, window_bounds = array<i64: 1, 4, 256>}]} {
    %c0 = arith.constant 0 : index
    %c0_0 = arith.constant 0 : index
    %c0_1 = arith.constant 0 : index
    %0 = vector.load %arg1[%c0, %c0_0, %c0_1] : memref<1x4x256xf32, #tpu.memory_space<vmem>>, vector<1x4x256xf32>
    %1 = vector.shape_cast %0 : vector<1x4x256xf32> to vector<4x256xf32>
    %c0_2 = arith.constant 0 : index
    %c0_3 = arith.constant 0 : index
    %c0_4 = arith.constant 0 : index
    %2 = vector.load %arg2[%c0_2, %c0_3, %c0_4] : memref<1x4x256xf32, #tpu.memory_space<vmem>>, vector<1x4x256xf32>
    %3 = vector.shape_cast %2 : vector<1x4x256xf32> to vector<4x256xf32>
    %cst = arith.constant dense<0.000000e+00> : vector<4xf32>
    %4 = vector.multi_reduction <add>, %1, %cst [1] : vector<4x256xf32> to vector<4xf32>
    %5 = vector.shape_cast %4 : vector<4xf32> to vector<4x1xf32>
    %cst_5 = arith.constant 2.560000e+02 : f32
    %6 = vector.broadcast %cst_5 : f32 to vector<4x1xf32>
    %7 = arith.divf %5, %6 : vector<4x1xf32>
    %cst_6 = arith.constant dense<0.000000e+00> : vector<4xf32>
    %8 = vector.multi_reduction <add>, %3, %cst_6 [1] : vector<4x256xf32> to vector<4xf32>
    %9 = vector.shape_cast %8 : vector<4xf32> to vector<4x1xf32>
    %cst_7 = arith.constant 2.560000e+02 : f32
    %10 = vector.broadcast %cst_7 : f32 to vector<4x1xf32>
    %11 = arith.divf %9, %10 : vector<4x1xf32>
    %cst_8 = arith.constant dense<0xFF800000> : vector<4xf32>
    %12 = vector.multi_reduction <maximumf>, %1, %cst_8 [1] : vector<4x256xf32> to vector<4xf32>
    %13 = vector.shape_cast %12 : vector<4xf32> to vector<4x1xf32>
    %cst_9 = arith.constant dense<0xFF800000> : vector<4xf32>
    %14 = vector.multi_reduction <maximumf>, %3, %cst_9 [1] : vector<4x256xf32> to vector<4xf32>
    %15 = vector.shape_cast %14 : vector<4xf32> to vector<4x1xf32>
    %c0_10 = arith.constant 0 : index
    %c0_11 = arith.constant 0 : index
    %16 = vector.load %arg8[%c0_10, %c0_11] : memref<4x8xf32, #tpu.memory_space<vmem>>, vector<4x8xf32>
    %17 = vector.broadcast %7 : vector<4x1xf32> to vector<4x8xf32>
    %18 = arith.mulf %16, %17 : vector<4x8xf32>
    %cst_12 = arith.constant dense<0.000000e+00> : vector<8xf32>
    %19 = vector.multi_reduction <add>, %18, %cst_12 [0] : vector<4x8xf32> to vector<8xf32>
    %20 = vector.shape_cast %19 : vector<8xf32> to vector<1x8xf32>
    %c0_13 = arith.constant 0 : index
    %c0_14 = arith.constant 0 : index
    %21 = vector.load %arg9[%c0_13, %c0_14] : memref<4x8xf32, #tpu.memory_space<vmem>>, vector<4x8xf32>
    %22 = vector.broadcast %11 : vector<4x1xf32> to vector<4x8xf32>
    %23 = arith.mulf %21, %22 : vector<4x8xf32>
    %cst_15 = arith.constant dense<0.000000e+00> : vector<8xf32>
    %24 = vector.multi_reduction <add>, %23, %cst_15 [0] : vector<4x8xf32> to vector<8xf32>
    %25 = vector.shape_cast %24 : vector<8xf32> to vector<1x8xf32>
    %26 = arith.addf %20, %25 : vector<1x8xf32>
    %c0_16 = arith.constant 0 : index
    %c0_17 = arith.constant 0 : index
    %27 = vector.load %arg10[%c0_16, %c0_17] : memref<4x8xf32, #tpu.memory_space<vmem>>, vector<4x8xf32>
    %28 = vector.broadcast %13 : vector<4x1xf32> to vector<4x8xf32>
    %29 = arith.mulf %27, %28 : vector<4x8xf32>
    %cst_18 = arith.constant dense<0.000000e+00> : vector<8xf32>
    %30 = vector.multi_reduction <add>, %29, %cst_18 [0] : vector<4x8xf32> to vector<8xf32>
    %31 = vector.shape_cast %30 : vector<8xf32> to vector<1x8xf32>
    %32 = arith.addf %26, %31 : vector<1x8xf32>
    %c0_19 = arith.constant 0 : index
    %c0_20 = arith.constant 0 : index
    %33 = vector.load %arg11[%c0_19, %c0_20] : memref<4x8xf32, #tpu.memory_space<vmem>>, vector<4x8xf32>
    %34 = vector.broadcast %15 : vector<4x1xf32> to vector<4x8xf32>
    %35 = arith.mulf %33, %34 : vector<4x8xf32>
    %cst_21 = arith.constant dense<0.000000e+00> : vector<8xf32>
    %36 = vector.multi_reduction <add>, %35, %cst_21 [0] : vector<4x8xf32> to vector<8xf32>
    %37 = vector.shape_cast %36 : vector<8xf32> to vector<1x8xf32>
    %38 = arith.addf %32, %37 : vector<1x8xf32>
    %c0_22 = arith.constant 0 : index
    %c0_23 = arith.constant 0 : index
    %39 = vector.load %arg12[%c0_22, %c0_23] : memref<1x8xf32, #tpu.memory_space<vmem>>, vector<1x8xf32>
    %40 = arith.addf %38, %39 : vector<1x8xf32>
    %cst_24 = arith.constant 0.000000e+00 : f32
    %41 = vector.broadcast %cst_24 : f32 to vector<1x8xf32>
    %42 = arith.maximumf %40, %41 : vector<1x8xf32>
    %c0_25 = arith.constant 0 : index
    %c0_26 = arith.constant 0 : index
    %43 = vector.load %arg13[%c0_25, %c0_26] : memref<4x8xf32, #tpu.memory_space<vmem>>, vector<4x8xf32>
    %44 = vector.broadcast %42 : vector<1x8xf32> to vector<4x8xf32>
    %45 = arith.mulf %43, %44 : vector<4x8xf32>
    %cst_27 = arith.constant dense<0.000000e+00> : vector<4xf32>
    %46 = vector.multi_reduction <add>, %45, %cst_27 [1] : vector<4x8xf32> to vector<4xf32>
    %47 = vector.shape_cast %46 : vector<4xf32> to vector<4x1xf32>
    %c0_28 = arith.constant 0 : index
    %c0_29 = arith.constant 0 : index
    %48 = vector.load %arg15[%c0_28, %c0_29] : memref<4x1xf32, #tpu.memory_space<vmem>>, vector<4x1xf32>
    %49 = arith.addf %47, %48 : vector<4x1xf32>
    %50 = arith.negf %49 : vector<4x1xf32>
    %51 = math.exp %50 : vector<4x1xf32>
    %cst_30 = arith.constant 1.000000e+00 : f32
    %52 = vector.broadcast %cst_30 : f32 to vector<4x1xf32>
    %53 = arith.addf %52, %51 : vector<4x1xf32>
    %54 = arith.divf %52, %53 : vector<4x1xf32>
    %c0_31 = arith.constant 0 : index
    %c0_32 = arith.constant 0 : index
    %55 = vector.load %arg14[%c0_31, %c0_32] : memref<4x8xf32, #tpu.memory_space<vmem>>, vector<4x8xf32>
    %56 = vector.broadcast %42 : vector<1x8xf32> to vector<4x8xf32>
    %57 = arith.mulf %55, %56 : vector<4x8xf32>
    %cst_33 = arith.constant dense<0.000000e+00> : vector<4xf32>
    %58 = vector.multi_reduction <add>, %57, %cst_33 [1] : vector<4x8xf32> to vector<4xf32>
    %59 = vector.shape_cast %58 : vector<4xf32> to vector<4x1xf32>
    %c0_34 = arith.constant 0 : index
    %c0_35 = arith.constant 0 : index
    %60 = vector.load %arg16[%c0_34, %c0_35] : memref<4x1xf32, #tpu.memory_space<vmem>>, vector<4x1xf32>
    %61 = arith.addf %59, %60 : vector<4x1xf32>
    %62 = arith.negf %61 : vector<4x1xf32>
    %63 = math.exp %62 : vector<4x1xf32>
    %cst_36 = arith.constant 1.000000e+00 : f32
    %64 = vector.broadcast %cst_36 : f32 to vector<4x1xf32>
    %65 = arith.addf %64, %63 : vector<4x1xf32>
    %66 = arith.divf %64, %65 : vector<4x1xf32>
    %c0_37 = arith.constant 0 : index
    %c0_38 = arith.constant 0 : index
    %67 = vector.load %arg3[%c0_37, %c0_38] : memref<4x4xf32, #tpu.memory_space<vmem>>, vector<4x4xf32>
    %cst_39 = arith.constant dense<0.000000e+00> : vector<4x256xf32>
    %68 = tpu.matmul %67, %1, %cst_39 {dimension_numbers = #tpu.dot_dimension_numbers<[1], [0], [0], [1], [0, 0, 1, 1], [], []>} : vector<4x4xf32>, vector<4x256xf32>, vector<4x256xf32> -> vector<4x256xf32>
    %c0_40 = arith.constant 0 : index
    %c0_41 = arith.constant 0 : index
    %69 = vector.load %arg4[%c0_40, %c0_41] : memref<4x4xf32, #tpu.memory_space<vmem>>, vector<4x4xf32>
    %cst_42 = arith.constant dense<0.000000e+00> : vector<4x256xf32>
    %70 = tpu.matmul %69, %3, %cst_42 {dimension_numbers = #tpu.dot_dimension_numbers<[1], [0], [0], [1], [0, 0, 1, 1], [], []>} : vector<4x4xf32>, vector<4x256xf32>, vector<4x256xf32> -> vector<4x256xf32>
    %71 = arith.addf %68, %70 : vector<4x256xf32>
    %c0_43 = arith.constant 0 : index
    %c0_44 = arith.constant 0 : index
    %72 = vector.load %arg5[%c0_43, %c0_44] : memref<4x1xf32, #tpu.memory_space<vmem>>, vector<4x1xf32>
    %73 = vector.broadcast %72 : vector<4x1xf32> to vector<4x256xf32>
    %74 = arith.addf %71, %73 : vector<4x256xf32>
    %cst_45 = arith.constant 0.000000e+00 : f32
    %75 = vector.broadcast %cst_45 : f32 to vector<4x256xf32>
    %76 = arith.maximumf %74, %75 : vector<4x256xf32>
    %c0_46 = arith.constant 0 : index
    %c0_47 = arith.constant 0 : index
    %77 = vector.load %arg6[%c0_46, %c0_47] : memref<2x4xf32, #tpu.memory_space<vmem>>, vector<2x4xf32>
    %cst_48 = arith.constant dense<0.000000e+00> : vector<2x256xf32>
    %78 = tpu.matmul %77, %76, %cst_48 {dimension_numbers = #tpu.dot_dimension_numbers<[1], [0], [0], [1], [0, 0, 1, 1], [], []>} : vector<2x4xf32>, vector<4x256xf32>, vector<2x256xf32> -> vector<2x256xf32>
    %c0_49 = arith.constant 0 : index
    %c0_50 = arith.constant 0 : index
    %79 = vector.load %arg7[%c0_49, %c0_50] : memref<2x1xf32, #tpu.memory_space<vmem>>, vector<2x1xf32>
    %80 = vector.broadcast %79 : vector<2x1xf32> to vector<2x256xf32>
    %81 = arith.addf %78, %80 : vector<2x256xf32>
    %82 = arith.negf %81 : vector<2x256xf32>
    %83 = math.exp %82 : vector<2x256xf32>
    %cst_51 = arith.constant 1.000000e+00 : f32
    %84 = vector.broadcast %cst_51 : f32 to vector<2x256xf32>
    %85 = arith.addf %84, %83 : vector<2x256xf32>
    %86 = arith.divf %84, %85 : vector<2x256xf32>
    %cst_52 = arith.constant 5.000000e-01 : f32
    %87 = vector.broadcast %cst_52 : f32 to vector<4x1xf32>
    %88 = arith.mulf %87, %66 : vector<4x1xf32>
    %89 = vector.extract_strided_slice %86 {offsets = [1, 0], sizes = [1, 256], strides = [1, 1]} : vector<2x256xf32> to vector<1x256xf32>
    %cst_53 = arith.constant 5.000000e-01 : f32
    %90 = vector.broadcast %cst_53 : f32 to vector<1x256xf32>
    %91 = arith.mulf %90, %89 : vector<1x256xf32>
    %92 = vector.broadcast %88 : vector<4x1xf32> to vector<4x256xf32>
    %93 = vector.broadcast %91 : vector<1x256xf32> to vector<4x256xf32>
    %94 = arith.addf %92, %93 : vector<4x256xf32>
    %cst_54 = arith.constant 5.000000e-01 : f32
    %95 = vector.broadcast %cst_54 : f32 to vector<4x1xf32>
    %96 = arith.mulf %95, %54 : vector<4x1xf32>
    %97 = vector.extract_strided_slice %86 {offsets = [0, 0], sizes = [1, 256], strides = [1, 1]} : vector<2x256xf32> to vector<1x256xf32>
    %cst_55 = arith.constant 5.000000e-01 : f32
    %98 = vector.broadcast %cst_55 : f32 to vector<1x256xf32>
    %99 = arith.mulf %98, %97 : vector<1x256xf32>
    %100 = vector.broadcast %96 : vector<4x1xf32> to vector<4x256xf32>
    %101 = vector.broadcast %99 : vector<1x256xf32> to vector<4x256xf32>
    %102 = arith.addf %100, %101 : vector<4x256xf32>
    %103 = arith.mulf %3, %94 : vector<4x256xf32>
    %104 = arith.addf %1, %103 : vector<4x256xf32>
    %c0_56 = arith.constant 0 : index
    %c0_57 = arith.constant 0 : index
    %c0_58 = arith.constant 0 : index
    %105 = vector.load %arg17[%c0_56, %c0_57, %c0_58] : memref<1x4x256xf32, #tpu.memory_space<vmem>>, vector<1x4x256xf32>
    %106 = vector.shape_cast %105 : vector<1x4x256xf32> to vector<4x256xf32>
    %107 = vector.shape_cast %104 : vector<4x256xf32> to vector<1x4x256xf32>
    tpu.vector_store %arg17[%c0_56, %c0_57, %c0_58], %107 {strides = array<i32>} : memref<1x4x256xf32, #tpu.memory_space<vmem>>, vector<1x4x256xf32>,
    %108 = arith.mulf %1, %102 : vector<4x256xf32>
    %109 = arith.addf %3, %108 : vector<4x256xf32>
    %c0_59 = arith.constant 0 : index
    %c0_60 = arith.constant 0 : index
    %c0_61 = arith.constant 0 : index
    %110 = vector.load %arg18[%c0_59, %c0_60, %c0_61] : memref<1x4x256xf32, #tpu.memory_space<vmem>>, vector<1x4x256xf32>
    %111 = vector.shape_cast %110 : vector<1x4x256xf32> to vector<4x256xf32>
    %112 = vector.shape_cast %109 : vector<4x256xf32> to vector<1x4x256xf32>
    tpu.vector_store %arg18[%c0_59, %c0_60, %c0_61], %112 {strides = array<i32>} : memref<1x4x256xf32, #tpu.memory_space<vmem>>, vector<1x4x256xf32>,
    return
  }
  func.func @transform_0(%arg0: i32) -> (i32, i32, i32) {
    %c0_i32 = arith.constant 0 : i32
    %c0_i32_0 = arith.constant 0 : i32
    %c0_i32_1 = arith.constant 0 : i32
    return %arg0, %c0_i32, %c0_i32_0 : i32, i32, i32
  }
  func.func @transform_1(%arg0: i32) -> (i32, i32, i32) {
    %c0_i32 = arith.constant 0 : i32
    %c0_i32_0 = arith.constant 0 : i32
    %c0_i32_1 = arith.constant 0 : i32
    return %arg0, %c0_i32, %c0_i32_0 : i32, i32, i32
  }
  func.func @transform_2(%arg0: i32) -> (i32, i32) {
    %c0_i32 = arith.constant 0 : i32
    %c0_i32_0 = arith.constant 0 : i32
    %c0_i32_1 = arith.constant 0 : i32
    return %c0_i32, %c0_i32_0 : i32, i32
  }
  func.func @transform_3(%arg0: i32) -> (i32, i32) {
    %c0_i32 = arith.constant 0 : i32
    %c0_i32_0 = arith.constant 0 : i32
    %c0_i32_1 = arith.constant 0 : i32
    return %c0_i32, %c0_i32_0 : i32, i32
  }
  func.func @transform_4(%arg0: i32) -> (i32, i32) {
    %c0_i32 = arith.constant 0 : i32
    %c0_i32_0 = arith.constant 0 : i32
    %c0_i32_1 = arith.constant 0 : i32
    return %c0_i32, %c0_i32_0 : i32, i32
  }
  func.func @transform_5(%arg0: i32) -> (i32, i32) {
    %c0_i32 = arith.constant 0 : i32
    %c0_i32_0 = arith.constant 0 : i32
    %c0_i32_1 = arith.constant 0 : i32
    return %c0_i32, %c0_i32_0 : i32, i32
  }
  func.func @transform_6(%arg0: i32) -> (i32, i32) {
    %c0_i32 = arith.constant 0 : i32
    %c0_i32_0 = arith.constant 0 : i32
    %c0_i32_1 = arith.constant 0 : i32
    return %c0_i32, %c0_i32_0 : i32, i32
  }
  func.func @transform_7(%arg0: i32) -> (i32, i32) {
    %c0_i32 = arith.constant 0 : i32
    %c0_i32_0 = arith.constant 0 : i32
    %c0_i32_1 = arith.constant 0 : i32
    return %c0_i32, %c0_i32_0 : i32, i32
  }
  func.func @transform_8(%arg0: i32) -> (i32, i32) {
    %c0_i32 = arith.constant 0 : i32
    %c0_i32_0 = arith.constant 0 : i32
    %c0_i32_1 = arith.constant 0 : i32
    return %c0_i32, %c0_i32_0 : i32, i32
  }
  func.func @transform_9(%arg0: i32) -> (i32, i32) {
    %c0_i32 = arith.constant 0 : i32
    %c0_i32_0 = arith.constant 0 : i32
    %c0_i32_1 = arith.constant 0 : i32
    return %c0_i32, %c0_i32_0 : i32, i32
  }
  func.func @transform_10(%arg0: i32) -> (i32, i32) {
    %c0_i32 = arith.constant 0 : i32
    %c0_i32_0 = arith.constant 0 : i32
    %c0_i32_1 = arith.constant 0 : i32
    return %c0_i32, %c0_i32_0 : i32, i32
  }
  func.func @transform_11(%arg0: i32) -> (i32, i32) {
    %c0_i32 = arith.constant 0 : i32
    %c0_i32_0 = arith.constant 0 : i32
    %c0_i32_1 = arith.constant 0 : i32
    return %c0_i32, %c0_i32_0 : i32, i32
  }
  func.func @transform_12(%arg0: i32) -> (i32, i32) {
    %c0_i32 = arith.constant 0 : i32
    %c0_i32_0 = arith.constant 0 : i32
    %c0_i32_1 = arith.constant 0 : i32
    return %c0_i32, %c0_i32_0 : i32, i32
  }
  func.func @transform_13(%arg0: i32) -> (i32, i32) {
    %c0_i32 = arith.constant 0 : i32
    %c0_i32_0 = arith.constant 0 : i32
    %c0_i32_1 = arith.constant 0 : i32
    return %c0_i32, %c0_i32_0 : i32, i32
  }
  func.func @transform_14(%arg0: i32) -> (i32, i32) {
    %c0_i32 = arith.constant 0 : i32
    %c0_i32_0 = arith.constant 0 : i32
    %c0_i32_1 = arith.constant 0 : i32
    return %c0_i32, %c0_i32_0 : i32, i32
  }
  func.func @transform_15(%arg0: i32) -> (i32, i32) {
    %c0_i32 = arith.constant 0 : i32
    %c0_i32_0 = arith.constant 0 : i32
    %c0_i32_1 = arith.constant 0 : i32
    return %c0_i32, %c0_i32_0 : i32, i32
  }
  func.func @transform_16(%arg0: i32) -> (i32, i32, i32) {
    %c0_i32 = arith.constant 0 : i32
    %c0_i32_0 = arith.constant 0 : i32
    %c0_i32_1 = arith.constant 0 : i32
    return %arg0, %c0_i32, %c0_i32_0 : i32, i32, i32
  }
  func.func @transform_17(%arg0: i32) -> (i32, i32, i32) {
    %c0_i32 = arith.constant 0 : i32
    %c0_i32_0 = arith.constant 0 : i32
    %c0_i32_1 = arith.constant 0 : i32
    return %arg0, %c0_i32, %c0_i32_0 : i32, i32, i32
  }
}

</mosaic_0001>

<llo_original>
// kernel: tpu_custom_call.1
$region0: #{tpu_custom_call.1}
  #allocation0 [shape = 'u32[]', space=smem, size = 0x4, offset = 0x4, fixed_abs, tag = 'smem constant byte address 0x4 - core index']
  #allocation1 [shape = 'u32[144,128]{1,0:T(1,128)}', space=vmem, size = 0x12000, scoped, tag = 'internal scratch']
  %s0 = inlined_call_operand.vmem [shape: f32[2,4,256], index: 0, kind: input, shape index: {}]
  %s1 = inlined_call_operand.hbm [shape: f32[2,4,256], index: 1, kind: input, shape index: {}]
  %s2 = inlined_call_operand.vmem [shape: f32[4,4], index: 2, kind: input, shape index: {}]
  %s3 = inlined_call_operand.vmem [shape: f32[4,4], index: 3, kind: input, shape index: {}]
  %s4 = inlined_call_operand.vmem [shape: f32[4,1], index: 4, kind: input, shape index: {}]
  %s5 = inlined_call_operand.hbm [shape: f32[2,4], index: 5, kind: input, shape index: {}]
  %s6 = inlined_call_operand.vmem [shape: f32[2,1], index: 6, kind: input, shape index: {}]
  %s7 = inlined_call_operand.vmem [shape: f32[4,8], index: 7, kind: input, shape index: {}]
  %s8 = inlined_call_operand.vmem [shape: f32[4,8], index: 8, kind: input, shape index: {}]
  %s9 = inlined_call_operand.vmem [shape: f32[4,8], index: 9, kind: input, shape index: {}]
  %s10 = inlined_call_operand.vmem [shape: f32[4,8], index: 10, kind: input, shape index: {}]
  %s11 = inlined_call_operand.vmem [shape: f32[1,8], index: 11, kind: input, shape index: {}]
  %s12 = inlined_call_operand.vmem [shape: f32[4,8], index: 12, kind: input, shape index: {}]
  %s13 = inlined_call_operand.vmem [shape: f32[4,8], index: 13, kind: input, shape index: {}]
  %s14 = inlined_call_operand.vmem [shape: f32[4,1], index: 14, kind: input, shape index: {}]
  %s15 = inlined_call_operand.vmem [shape: f32[4,1], index: 15, kind: input, shape index: {}]
  %s16 = inlined_call_operand.hbm [shape: f32[2,4,256], index: 16, kind: output, shape index: {0}]
  %s17 = inlined_call_operand.hbm [shape: f32[2,4,256], index: 17, kind: output, shape index: {1}]
  %18 = xla_tuple %s16, %s17
  %s19 = sld [smem:[#allocation0]]
  $region113: #{tpu_custom_call.1} parent=0
    _
  %s21 = ssub.s32 1, %s19
  %s22 = scalar_select 0, %s21, %s19
  $region1: #{tpu_custom_call.1} parent=0
    #allocation2 [shape = 'u8[8192]{0}', space=vmem, size = 0x2000, scoped, tag = 'input window, operand 1']
    #allocation3 [shape = 's32[2]{0}', space=sflag, size = 0x8, scoped, tag = 'scoped memory for tpu_custom_call.1']
    #allocation4 [shape = 's32[2]{0}', space=sflag, size = 0x8, scoped, tag = 'scoped memory for tpu_custom_call.1']
    #allocation5 [shape = 'u8[1024]{0}', space=vmem, size = 0x400, scoped, tag = 'input window, operand 5, single buffered']
    #allocation6 [shape = 's32[1]{0}', space=sflag, size = 0x4, scoped, tag = 'scoped memory for tpu_custom_call.1']
    #allocation7 [shape = 'u8[8192]{0}', space=vmem, size = 0x2000, scoped, tag = 'output window, operand 0']
    #allocation8 [shape = 'u8[8192]{0}', space=vmem, size = 0x2000, scoped, tag = 'output window, operand 1']
    #allocation9 [shape = 's32[2]{0}', space=sflag, size = 0x8, scoped, tag = 'scoped memory for tpu_custom_call.1']
    %23 = vsyncpa [#allocation3], 0
    %s24 = scalar_lea.sflag [#allocation3], 1
    %25 = vsyncpa %s24, 0
    %26 = vsyncpa [#allocation6], 0
    %27 = vsyncpa [#allocation4], 0
    %s28 = scalar_lea.sflag [#allocation4], 1
    %29 = vsyncpa %s28, 0
    %30 = vsyncpa [#allocation9], 0
    %s31 = scalar_lea.sflag [#allocation9], 1
    %32 = vsyncpa %s31, 0
    loop: start=0, step=1, limit=4
    $region2: #{tpu_custom_call.1} parent=1 // loop_pre_header
      _
    $region3: #{tpu_custom_call.1} parent=1 // loop_header
      %s34 = sphi 0, %s38
      %p35 = scmp.ge.s32.totalorder %s34, 4
      %s44 = sphi 0, %s46
      %s47 = sphi 0, %s44
      %s48 = sphi 0, %s47
      %s64 = sphi 0, %s48
      %s70 = sphi 0, %s72
      %s73 = sphi 0, %s70
      %s74 = sphi 0, %s73
      %s90 = sphi 0, %s74
      %s94 = sphi 0, %s94
      %s96 = sphi 0, %s94
      %s97 = sphi 0, %s96
      %s111 = sphi 0, %s97
      %s115 = sphi 0, %s115
      %s117 = sphi 0, %s115
      %s118 = sphi 0, %s117
      %s132 = sphi 0, %s118
      %s136 = sphi 0, %s136
      %s138 = sphi 0, %s136
      %s139 = sphi 0, %s138
      %s153 = sphi 0, %s139
      %s157 = sphi 0, %s157
      %s159 = sphi 0, %s157
      %s160 = sphi 0, %s159
      %s174 = sphi 0, %s160
      %s178 = sphi 0, %s178
      %s180 = sphi 0, %s178
      %s181 = sphi 0, %s180
      %s195 = sphi 0, %s181
      %s199 = sphi 0, %s199
      %s201 = sphi 0, %s199
      %s202 = sphi 0, %s201
      %s216 = sphi 0, %s202
      %s220 = sphi 0, %s220
      %s222 = sphi 0, %s220
      %s223 = sphi 0, %s222
      %s237 = sphi 0, %s223
      %s241 = sphi 0, %s241
      %s243 = sphi 0, %s241
      %s244 = sphi 0, %s243
      %s258 = sphi 0, %s244
      %s262 = sphi 0, %s262
      %s264 = sphi 0, %s262
      %s265 = sphi 0, %s264
      %s279 = sphi 0, %s265
      %s283 = sphi 0, %s283
      %s285 = sphi 0, %s283
      %s286 = sphi 0, %s285
      %s300 = sphi 0, %s286
      %s304 = sphi 0, %s304
      %s306 = sphi 0, %s304
      %s307 = sphi 0, %s306
      %s321 = sphi 0, %s307
      %s325 = sphi 0, %s325
      %s327 = sphi 0, %s325
      %s328 = sphi 0, %s327
      %s342 = sphi 0, %s328
      %s346 = sphi 0, %s346
      %s348 = sphi 0, %s346
      %s349 = sphi 0, %s348
      %s363 = sphi 0, %s349
      %s367 = sphi 0, %s367
      %s369 = sphi 0, %s367
      %s370 = sphi 0, %s369
      %s384 = sphi 0, %s370
      %s390 = sphi 0, %s392
      %s393 = sphi 0, %s390
      %s394 = sphi 0, %s393
      %s410 = sphi 0, %s394
      %s416 = sphi 0, %s418
      %s419 = sphi 0, %s416
      %s420 = sphi 0, %s419
      %s436 = sphi 0, %s420
    $region4: #{tpu_custom_call.1} parent=1 // loop_header_branch
      %37 = sbr.rel (%p35) target = $region8
    $region5: #{tpu_custom_call.1} parent=1 // loop_body
      %s39 = ssub.s32 %s34, 1
      %s40 = ssub.s32 %s34, 2
      %s41 = sadd.s32 %s34, 1
      %s42 = ssub.s32 %s34, %s41
      %p43 = scmp.eq.s32.totalorder %s42, 0
      %s45 = sadd.s32 %s44, 1
      %s46 = scalar_select %p43, %s44, %s45
      %p49 = pneg %p43
      %p50 = scmp.eq.s32.totalorder %s34, 1
      %p51 = por %p49, %p50
      %p52 = scmp.ne.s32.totalorder %s44, %s47
      %p53 = scmp.eq.s32.totalorder %s34, 0
      %p54 = por %p52, %p53
      %p55 = scmp.ne.s32.totalorder %s44, %s47
      %p56 = scmp.eq.s32.totalorder %s39, 1
      %p57 = por %p55, %p56
      %p58 = scmp.ne.s32.totalorder %s47, %s48
      %p59 = scmp.eq.s32.totalorder %s39, 0
      %p60 = por %p58, %p59
      %p61 = scmp.ne.s32.totalorder %s47, %s48
      %p62 = scmp.eq.s32.totalorder %s40, 1
      %p63 = por %p61, %p62
      %p65 = scmp.ne.s32.totalorder %s48, %s64
      %p66 = scmp.eq.s32.totalorder %s40, 0
      %p67 = por %p65, %p66
      %s68 = ssub.s32 %s34, %s41
      %p69 = scmp.eq.s32.totalorder %s68, 0
      %s71 = sadd.s32 %s70, 1
      %s72 = scalar_select %p69, %s70, %s71
      %p75 = pneg %p69
      %p76 = scmp.eq.s32.totalorder %s34, 1
      %p77 = por %p75, %p76
      %p78 = scmp.ne.s32.totalorder %s70, %s73
      %p79 = scmp.eq.s32.totalorder %s34, 0
      %p80 = por %p78, %p79
      %p81 = scmp.ne.s32.totalorder %s70, %s73
      %p82 = scmp.eq.s32.totalorder %s39, 1
      %p83 = por %p81, %p82
      %p84 = scmp.ne.s32.totalorder %s73, %s74
      %p85 = scmp.eq.s32.totalorder %s39, 0
      %p86 = por %p84, %p85
      %p87 = scmp.ne.s32.totalorder %s73, %s74
      %p88 = scmp.eq.s32.totalorder %s40, 1
      %p89 = por %p87, %p88
      %p91 = scmp.ne.s32.totalorder %s74, %s90
      %p92 = scmp.eq.s32.totalorder %s40, 0
      %p93 = por %p91, %p92
      %s95 = sadd.s32 %s94, 1
      %p98 = scmp.eq.s32.totalorder %s34, 1
      %p99 = scmp.ne.s32.totalorder %s94, %s96
      %p100 = scmp.eq.s32.totalorder %s34, 0
      %p101 = por %p99, %p100
      %p102 = scmp.ne.s32.totalorder %s94, %s96
      %p103 = scmp.eq.s32.totalorder %s39, 1
      %p104 = por %p102, %p103
      %p105 = scmp.ne.s32.totalorder %s96, %s97
      %p106 = scmp.eq.s32.totalorder %s39, 0
      %p107 = por %p105, %p106
      %p108 = scmp.ne.s32.totalorder %s96, %s97
      %p109 = scmp.eq.s32.totalorder %s40, 1
      %p110 = por %p108, %p109
      %p112 = scmp.ne.s32.totalorder %s97, %s111
      %p113 = scmp.eq.s32.totalorder %s40, 0
      %p114 = por %p112, %p113
      %s116 = sadd.s32 %s115, 1
      %p119 = scmp.eq.s32.totalorder %s34, 1
      %p120 = scmp.ne.s32.totalorder %s115, %s117
      %p121 = scmp.eq.s32.totalorder %s34, 0
      %p122 = por %p120, %p121
      %p123 = scmp.ne.s32.totalorder %s115, %s117
      %p124 = scmp.eq.s32.totalorder %s39, 1
      %p125 = por %p123, %p124
      %p126 = scmp.ne.s32.totalorder %s117, %s118
      %p127 = scmp.eq.s32.totalorder %s39, 0
      %p128 = por %p126, %p127
      %p129 = scmp.ne.s32.totalorder %s117, %s118
      %p130 = scmp.eq.s32.totalorder %s40, 1
      %p131 = por %p129, %p130
      %p133 = scmp.ne.s32.totalorder %s118, %s132
      %p134 = scmp.eq.s32.totalorder %s40, 0
      %p135 = por %p133, %p134
      %s137 = sadd.s32 %s136, 1
      %p140 = scmp.eq.s32.totalorder %s34, 1
      %p141 = scmp.ne.s32.totalorder %s136, %s138
      %p142 = scmp.eq.s32.totalorder %s34, 0
      %p143 = por %p141, %p142
      %p144 = scmp.ne.s32.totalorder %s136, %s138
      %p145 = scmp.eq.s32.totalorder %s39, 1
      %p146 = por %p144, %p145
      %p147 = scmp.ne.s32.totalorder %s138, %s139
      %p148 = scmp.eq.s32.totalorder %s39, 0
      %p149 = por %p147, %p148
      %p150 = scmp.ne.s32.totalorder %s138, %s139
      %p151 = scmp.eq.s32.totalorder %s40, 1
      %p152 = por %p150, %p151
      %p154 = scmp.ne.s32.totalorder %s139, %s153
      %p155 = scmp.eq.s32.totalorder %s40, 0
      %p156 = por %p154, %p155
      %s158 = sadd.s32 %s157, 1
      %p161 = scmp.eq.s32.totalorder %s34, 1
      %p162 = scmp.ne.s32.totalorder %s157, %s159
      %p163 = scmp.eq.s32.totalorder %s34, 0
      %p164 = por %p162, %p163
      %p165 = scmp.ne.s32.totalorder %s157, %s159
      %p166 = scmp.eq.s32.totalorder %s39, 1
      %p167 = por %p165, %p166
      %p168 = scmp.ne.s32.totalorder %s159, %s160
      %p169 = scmp.eq.s32.totalorder %s39, 0
      %p170 = por %p168, %p169
      %p171 = scmp.ne.s32.totalorder %s159, %s160
      %p172 = scmp.eq.s32.totalorder %s40, 1
      %p173 = por %p171, %p172
      %p175 = scmp.ne.s32.totalorder %s160, %s174
      %p176 = scmp.eq.s32.totalorder %s40, 0
      %p177 = por %p175, %p176
      %s179 = sadd.s32 %s178, 1
      %p182 = scmp.eq.s32.totalorder %s34, 1
      %p183 = scmp.ne.s32.totalorder %s178, %s180
      %p184 = scmp.eq.s32.totalorder %s34, 0
      %p185 = por %p183, %p184
      %p186 = scmp.ne.s32.totalorder %s178, %s180
      %p187 = scmp.eq.s32.totalorder %s39, 1
      %p188 = por %p186, %p187
      %p189 = scmp.ne.s32.totalorder %s180, %s181
      %p190 = scmp.eq.s32.totalorder %s39, 0
      %p191 = por %p189, %p190
      %p192 = scmp.ne.s32.totalorder %s180, %s181
      %p193 = scmp.eq.s32.totalorder %s40, 1
      %p194 = por %p192, %p193
      %p196 = scmp.ne.s32.totalorder %s181, %s195
      %p197 = scmp.eq.s32.totalorder %s40, 0
      %p198 = por %p196, %p197
      %s200 = sadd.s32 %s199, 1
      %p203 = scmp.eq.s32.totalorder %s34, 1
      %p204 = scmp.ne.s32.totalorder %s199, %s201
      %p205 = scmp.eq.s32.totalorder %s34, 0
      %p206 = por %p204, %p205
      %p207 = scmp.ne.s32.totalorder %s199, %s201
      %p208 = scmp.eq.s32.totalorder %s39, 1
      %p209 = por %p207, %p208
      %p210 = scmp.ne.s32.totalorder %s201, %s202
      %p211 = scmp.eq.s32.totalorder %s39, 0
      %p212 = por %p210, %p211
      %p213 = scmp.ne.s32.totalorder %s201, %s202
      %p214 = scmp.eq.s32.totalorder %s40, 1
      %p215 = por %p213, %p214
      %p217 = scmp.ne.s32.totalorder %s202, %s216
      %p218 = scmp.eq.s32.totalorder %s40, 0
      %p219 = por %p217, %p218
      %s221 = sadd.s32 %s220, 1
      %p224 = scmp.eq.s32.totalorder %s34, 1
      %p225 = scmp.ne.s32.totalorder %s220, %s222
      %p226 = scmp.eq.s32.totalorder %s34, 0
      %p227 = por %p225, %p226
      %p228 = scmp.ne.s32.totalorder %s220, %s222
      %p229 = scmp.eq.s32.totalorder %s39, 1
      %p230 = por %p228, %p229
      %p231 = scmp.ne.s32.totalorder %s222, %s223
      %p232 = scmp.eq.s32.totalorder %s39, 0
      %p233 = por %p231, %p232
      %p234 = scmp.ne.s32.totalorder %s222, %s223
      %p235 = scmp.eq.s32.totalorder %s40, 1
      %p236 = por %p234, %p235
      %p238 = scmp.ne.s32.totalorder %s223, %s237
      %p239 = scmp.eq.s32.totalorder %s40, 0
      %p240 = por %p238, %p239
      %s242 = sadd.s32 %s241, 1
      %p245 = scmp.eq.s32.totalorder %s34, 1
      %p246 = scmp.ne.s32.totalorder %s241, %s243
      %p247 = scmp.eq.s32.totalorder %s34, 0
      %p248 = por %p246, %p247
      %p249 = scmp.ne.s32.totalorder %s241, %s243
      %p250 = scmp.eq.s32.totalorder %s39, 1
      %p251 = por %p249, %p250
      %p252 = scmp.ne.s32.totalorder %s243, %s244
      %p253 = scmp.eq.s32.totalorder %s39, 0
      %p254 = por %p252, %p253
      %p255 = scmp.ne.s32.totalorder %s243, %s244
      %p256 = scmp.eq.s32.totalorder %s40, 1
      %p257 = por %p255, %p256
      %p259 = scmp.ne.s32.totalorder %s244, %s258
      %p260 = scmp.eq.s32.totalorder %s40, 0
      %p261 = por %p259, %p260
      %s263 = sadd.s32 %s262, 1
      %p266 = scmp.eq.s32.totalorder %s34, 1
      %p267 = scmp.ne.s32.totalorder %s262, %s264
      %p268 = scmp.eq.s32.totalorder %s34, 0
      %p269 = por %p267, %p268
      %p270 = scmp.ne.s32.totalorder %s262, %s264
      %p271 = scmp.eq.s32.totalorder %s39, 1
      %p272 = por %p270, %p271
      %p273 = scmp.ne.s32.totalorder %s264, %s265
      %p274 = scmp.eq.s32.totalorder %s39, 0
      %p275 = por %p273, %p274
      %p276 = scmp.ne.s32.totalorder %s264, %s265
      %p277 = scmp.eq.s32.totalorder %s40, 1
      %p278 = por %p276, %p277
      %p280 = scmp.ne.s32.totalorder %s265, %s279
      %p281 = scmp.eq.s32.totalorder %s40, 0
      %p282 = por %p280, %p281
      %s284 = sadd.s32 %s283, 1
      %p287 = scmp.eq.s32.totalorder %s34, 1
      %p288 = scmp.ne.s32.totalorder %s283, %s285
      %p289 = scmp.eq.s32.totalorder %s34, 0
      %p290 = por %p288, %p289
      %p291 = scmp.ne.s32.totalorder %s283, %s285
      %p292 = scmp.eq.s32.totalorder %s39, 1
      %p293 = por %p291, %p292
      %p294 = scmp.ne.s32.totalorder %s285, %s286
      %p295 = scmp.eq.s32.totalorder %s39, 0
      %p296 = por %p294, %p295
      %p297 = scmp.ne.s32.totalorder %s285, %s286
      %p298 = scmp.eq.s32.totalorder %s40, 1
      %p299 = por %p297, %p298
      %p301 = scmp.ne.s32.totalorder %s286, %s300
      %p302 = scmp.eq.s32.totalorder %s40, 0
      %p303 = por %p301, %p302
      %s305 = sadd.s32 %s304, 1
      %p308 = scmp.eq.s32.totalorder %s34, 1
      %p309 = scmp.ne.s32.totalorder %s304, %s306
      %p310 = scmp.eq.s32.totalorder %s34, 0
      %p311 = por %p309, %p310
      %p312 = scmp.ne.s32.totalorder %s304, %s306
      %p313 = scmp.eq.s32.totalorder %s39, 1
      %p314 = por %p312, %p313
      %p315 = scmp.ne.s32.totalorder %s306, %s307
      %p316 = scmp.eq.s32.totalorder %s39, 0
      %p317 = por %p315, %p316
      %p318 = scmp.ne.s32.totalorder %s306, %s307
      %p319 = scmp.eq.s32.totalorder %s40, 1
      %p320 = por %p318, %p319
      %p322 = scmp.ne.s32.totalorder %s307, %s321
      %p323 = scmp.eq.s32.totalorder %s40, 0
      %p324 = por %p322, %p323
      %s326 = sadd.s32 %s325, 1
      %p329 = scmp.eq.s32.totalorder %s34, 1
      %p330 = scmp.ne.s32.totalorder %s325, %s327
      %p331 = scmp.eq.s32.totalorder %s34, 0
      %p332 = por %p330, %p331
      %p333 = scmp.ne.s32.totalorder %s325, %s327
      %p334 = scmp.eq.s32.totalorder %s39, 1
      %p335 = por %p333, %p334
      %p336 = scmp.ne.s32.totalorder %s327, %s328
      %p337 = scmp.eq.s32.totalorder %s39, 0
      %p338 = por %p336, %p337
      %p339 = scmp.ne.s32.totalorder %s327, %s328
      %p340 = scmp.eq.s32.totalorder %s40, 1
      %p341 = por %p339, %p340
      %p343 = scmp.ne.s32.totalorder %s328, %s342
      %p344 = scmp.eq.s32.totalorder %s40, 0
      %p345 = por %p343, %p344
      %s347 = sadd.s32 %s346, 1
      %p350 = scmp.eq.s32.totalorder %s34, 1
      %p351 = scmp.ne.s32.totalorder %s346, %s348
      %p352 = scmp.eq.s32.totalorder %s34, 0
      %p353 = por %p351, %p352
      %p354 = scmp.ne.s32.totalorder %s346, %s348
      %p355 = scmp.eq.s32.totalorder %s39, 1
      %p356 = por %p354, %p355
      %p357 = scmp.ne.s32.totalorder %s348, %s349
      %p358 = scmp.eq.s32.totalorder %s39, 0
      %p359 = por %p357, %p358
      %p360 = scmp.ne.s32.totalorder %s348, %s349
      %p361 = scmp.eq.s32.totalorder %s40, 1
      %p362 = por %p360, %p361
      %p364 = scmp.ne.s32.totalorder %s349, %s363
      %p365 = scmp.eq.s32.totalorder %s40, 0
      %p366 = por %p364, %p365
      %s368 = sadd.s32 %s367, 1
      %p371 = scmp.eq.s32.totalorder %s34, 1
      %p372 = scmp.ne.s32.totalorder %s367, %s369
      %p373 = scmp.eq.s32.totalorder %s34, 0
      %p374 = por %p372, %p373
      %p375 = scmp.ne.s32.totalorder %s367, %s369
      %p376 = scmp.eq.s32.totalorder %s39, 1
      %p377 = por %p375, %p376
      %p378 = scmp.ne.s32.totalorder %s369, %s370
      %p379 = scmp.eq.s32.totalorder %s39, 0
      %p380 = por %p378, %p379
      %p381 = scmp.ne.s32.totalorder %s369, %s370
      %p382 = scmp.eq.s32.totalorder %s40, 1
      %p383 = por %p381, %p382
      %p385 = scmp.ne.s32.totalorder %s370, %s384
      %p386 = scmp.eq.s32.totalorder %s40, 0
      %p387 = por %p385, %p386
      %s388 = ssub.s32 %s34, %s41
      %p389 = scmp.eq.s32.totalorder %s388, 0
      %s391 = sadd.s32 %s390, 1
      %s392 = scalar_select %p389, %s390, %s391
      %p395 = pneg %p389
      %p396 = scmp.eq.s32.totalorder %s34, 1
      %p397 = por %p395, %p396
      %p398 = scmp.ne.s32.totalorder %s390, %s393
      %p399 = scmp.eq.s32.totalorder %s34, 0
      %p400 = por %p398, %p399
      %p401 = scmp.ne.s32.totalorder %s390, %s393
      %p402 = scmp.eq.s32.totalorder %s39, 1
      %p403 = por %p401, %p402
      %p404 = scmp.ne.s32.totalorder %s393, %s394
      %p405 = scmp.eq.s32.totalorder %s39, 0
      %p406 = por %p404, %p405
      %p407 = scmp.ne.s32.totalorder %s393, %s394
      %p408 = scmp.eq.s32.totalorder %s40, 1
      %p409 = por %p407, %p408
      %p411 = scmp.ne.s32.totalorder %s394, %s410
      %p412 = scmp.eq.s32.totalorder %s40, 0
      %p413 = por %p411, %p412
      %s414 = ssub.s32 %s34, %s41
      %p415 = scmp.eq.s32.totalorder %s414, 0
      %s417 = sadd.s32 %s416, 1
      %s418 = scalar_select %p415, %s416, %s417
      %p421 = pneg %p415
      %p422 = scmp.eq.s32.totalorder %s34, 1
      %p423 = por %p421, %p422
      %p424 = scmp.ne.s32.totalorder %s416, %s419
      %p425 = scmp.eq.s32.totalorder %s34, 0
      %p426 = por %p424, %p425
      %p427 = scmp.ne.s32.totalorder %s416, %s419
      %p428 = scmp.eq.s32.totalorder %s39, 1
      %p429 = por %p427, %p428
      %p430 = scmp.ne.s32.totalorder %s419, %s420
      %p431 = scmp.eq.s32.totalorder %s39, 0
      %p432 = por %p430, %p431
      %p433 = scmp.ne.s32.totalorder %s419, %s420
      %p434 = scmp.eq.s32.totalorder %s40, 1
      %p435 = por %p433, %p434
      %p437 = scmp.ne.s32.totalorder %s420, %s436
      %p438 = scmp.eq.s32.totalorder %s40, 0
      %p439 = por %p437, %p438
      %p440 = scmp.le.s32.totalorder 1, %s34
      %p441 = scmp.lt.s32.totalorder %s34, 3
      %p442 = pnand %p440, %p441
      %p443 = pneg %p442
      // Predicated region
      $region9: #{tpu_custom_call.1} parent=5 // pred_check
        _
      $region10: #{tpu_custom_call.1} parent=5 // pred_check_branch
        %445 = sbr.rel (%p442) target = $region12
      $region11: #{tpu_custom_call.1} parent=5 // pred_region
        %s446 = ssub.s32 %s34, 1
        // Predicated region
        $region13: #{tpu_custom_call.1} parent=11 // pred_check
          %p447 = pneg %p107
        $region14: #{tpu_custom_call.1} parent=11 // pred_check_branch
          %449 = sbr.rel (%p447) target = $region16
        $region15: #{tpu_custom_call.1} parent=11 // pred_region
          _
        $region16: #{tpu_custom_call.1} parent=11 // pred_fallthru
          _
        // Predicated region
        $region17: #{tpu_custom_call.1} parent=11 // pred_check
          %p450 = pneg %p128
        $region18: #{tpu_custom_call.1} parent=11 // pred_check_branch
          %452 = sbr.rel (%p450) target = $region20
        $region19: #{tpu_custom_call.1} parent=11 // pred_region
          _
        $region20: #{tpu_custom_call.1} parent=11 // pred_fallthru
          _
        // Predicated region
        $region21: #{tpu_custom_call.1} parent=11 // pred_check
          %p453 = pneg %p149
        $region22: #{tpu_custom_call.1} parent=11 // pred_check_branch
          %455 = sbr.rel (%p453) target = $region24
        $region23: #{tpu_custom_call.1} parent=11 // pred_region
          _
        $region24: #{tpu_custom_call.1} parent=11 // pred_fallthru
          _
        // Predicated region
        $region25: #{tpu_custom_call.1} parent=11 // pred_check
          %p456 = pneg %p170
        $region26: #{tpu_custom_call.1} parent=11 // pred_check_branch
          %458 = sbr.rel (%p456) target = $region28
        $region27: #{tpu_custom_call.1} parent=11 // pred_region
          %s460 = ssub.s32 32, 32
          %461 = vsyncadd [#allocation6], %s460
          %s463 = sshll.u32 [#allocation5], 4
          %s464 = int_to_ptr.vmem [resolvable:$true] %s463
          %466 = dma.hbm_to_vmem [thread:$0]  %s5, 32, %s464, [#allocation6]
        $region28: #{tpu_custom_call.1} parent=11 // pred_fallthru
          _
        // Predicated region
        $region29: #{tpu_custom_call.1} parent=11 // pred_check
          %p467 = pneg %p191
        $region30: #{tpu_custom_call.1} parent=11 // pred_check_branch
          %469 = sbr.rel (%p467) target = $region32
        $region31: #{tpu_custom_call.1} parent=11 // pred_region
          _
        $region32: #{tpu_custom_call.1} parent=11 // pred_fallthru
          _
        // Predicated region
        $region33: #{tpu_custom_call.1} parent=11 // pred_check
          %p470 = pneg %p212
        $region34: #{tpu_custom_call.1} parent=11 // pred_check_branch
          %472 = sbr.rel (%p470) target = $region36
        $region35: #{tpu_custom_call.1} parent=11 // pred_region
          _
        $region36: #{tpu_custom_call.1} parent=11 // pred_fallthru
          _
        // Predicated region
        $region37: #{tpu_custom_call.1} parent=11 // pred_check
          %p473 = pneg %p233
        $region38: #{tpu_custom_call.1} parent=11 // pred_check_branch
          %475 = sbr.rel (%p473) target = $region40
        $region39: #{tpu_custom_call.1} parent=11 // pred_region
          _
        $region40: #{tpu_custom_call.1} parent=11 // pred_fallthru
          _
        // Predicated region
        $region41: #{tpu_custom_call.1} parent=11 // pred_check
          %p476 = pneg %p254
        $region42: #{tpu_custom_call.1} parent=11 // pred_check_branch
          %478 = sbr.rel (%p476) target = $region44
        $region43: #{tpu_custom_call.1} parent=11 // pred_region
          _
        $region44: #{tpu_custom_call.1} parent=11 // pred_fallthru
          _
        // Predicated region
        $region45: #{tpu_custom_call.1} parent=11 // pred_check
          %p479 = pneg %p275
        $region46: #{tpu_custom_call.1} parent=11 // pred_check_branch
          %481 = sbr.rel (%p479) target = $region48
        $region47: #{tpu_custom_call.1} parent=11 // pred_region
          _
        $region48: #{tpu_custom_call.1} parent=11 // pred_fallthru
          _
        // Predicated region
        $region49: #{tpu_custom_call.1} parent=11 // pred_check
          %p482 = pneg %p296
        $region50: #{tpu_custom_call.1} parent=11 // pred_check_branch
          %484 = sbr.rel (%p482) target = $region52
        $region51: #{tpu_custom_call.1} parent=11 // pred_region
          _
        $region52: #{tpu_custom_call.1} parent=11 // pred_fallthru
          _
        // Predicated region
        $region53: #{tpu_custom_call.1} parent=11 // pred_check
          %p485 = pneg %p317
        $region54: #{tpu_custom_call.1} parent=11 // pred_check_branch
          %487 = sbr.rel (%p485) target = $region56
        $region55: #{tpu_custom_call.1} parent=11 // pred_region
          _
        $region56: #{tpu_custom_call.1} parent=11 // pred_fallthru
          _
        // Predicated region
        $region57: #{tpu_custom_call.1} parent=11 // pred_check
          %p488 = pneg %p338
        $region58: #{tpu_custom_call.1} parent=11 // pred_check_branch
          %490 = sbr.rel (%p488) target = $region60
        $region59: #{tpu_custom_call.1} parent=11 // pred_region
          _
        $region60: #{tpu_custom_call.1} parent=11 // pred_fallthru
          _
        // Predicated region
        $region61: #{tpu_custom_call.1} parent=11 // pred_check
          %p491 = pneg %p359
        $region62: #{tpu_custom_call.1} parent=11 // pred_check_branch
          %493 = sbr.rel (%p491) target = $region64
        $region63: #{tpu_custom_call.1} parent=11 // pred_region
          _
        $region64: #{tpu_custom_call.1} parent=11 // pred_fallthru
          _
        // Predicated region
        $region65: #{tpu_custom_call.1} parent=11 // pred_check
          %p494 = pneg %p380
        $region66: #{tpu_custom_call.1} parent=11 // pred_check_branch
          %496 = sbr.rel (%p494) target = $region68
        $region67: #{tpu_custom_call.1} parent=11 // pred_region
          _
        $region68: #{tpu_custom_call.1} parent=11 // pred_fallthru
          _
      $region12: #{tpu_custom_call.1} parent=5 // pred_fallthru
        _
      %p497 = scmp.lt.s32.totalorder %s34, 2
      // Predicated region
      $region69: #{tpu_custom_call.1} parent=5 // pred_check
        %p498 = pneg %p497
      $region70: #{tpu_custom_call.1} parent=5 // pred_check_branch
        %500 = sbr.rel (%p498) target = $region72
      $region71: #{tpu_custom_call.1} parent=5 // pred_region
        // Predicated region
        $region73: #{tpu_custom_call.1} parent=71 // pred_check
          %p501 = pneg %p54
        $region74: #{tpu_custom_call.1} parent=71 // pred_check_branch
          %503 = sbr.rel (%p501) target = $region76
        $region75: #{tpu_custom_call.1} parent=71 // pred_region
          %p504 = scmp.lt.s32.totalorder %s34, 1
          %s505 = scalar_select %p504, %s34, 1
          %s506 = smul.addr %s505, 2
          %s507 = smul.addr %s506, 4
          %s508 = scalar_lea.vmem %s0, %s507
        $region76: #{tpu_custom_call.1} parent=71 // pred_fallthru
          _
        // Predicated region
        $region77: #{tpu_custom_call.1} parent=71 // pred_check
          %p509 = pneg %p80
        $region78: #{tpu_custom_call.1} parent=71 // pred_check_branch
          %511 = sbr.rel (%p509) target = $region80
        $region79: #{tpu_custom_call.1} parent=71 // pred_region
          %s512 = sand.u32 %s70, 1
          %s513 = scalar_lea.sflag [#allocation3], %s512
          %s514 = sand.u32 %s70, 1
          %s515 = smul.addr %s514, 8
          %s516 = scalar_lea.vmem [#allocation2], %s515
          %s518 = ssub.s32 128, 128
          %519 = vsyncadd %s513, %s518
          %s520 = smul.addr %s34, 2
          %s521 = smul.addr %s520, 64
          %s522 = scalar_lea.hbm %s1, %s521
          %s524 = sshll.u32 %s516, 4
          %s525 = int_to_ptr.vmem [resolvable:$true] %s524
          %527 = dma.hbm_to_vmem [thread:$0]  %s522, 128, %s525, %s513
        $region80: #{tpu_custom_call.1} parent=71 // pred_fallthru
          _
      $region72: #{tpu_custom_call.1} parent=5 // pred_fallthru
        _
      %p528 = scmp.le.s32.totalorder 1, %s34
      %p529 = scmp.lt.s32.totalorder %s34, 3
      %p530 = pnand %p528, %p529
      %p531 = pneg %p530
      // Predicated region
      $region81: #{tpu_custom_call.1} parent=5 // pred_check
        _
      $region82: #{tpu_custom_call.1} parent=5 // pred_check_branch
        %533 = sbr.rel (%p530) target = $region84
      $region83: #{tpu_custom_call.1} parent=5 // pred_region
        %s534 = ssub.s32 %s34, 1
        %s535 = sand.u32 %s73, 1
        %s536 = scalar_lea.sflag [#allocation3], %s535
        %s537 = sand.u32 %s73, 1
        %s538 = smul.addr %s537, 8
        %s539 = scalar_lea.vmem [#allocation2], %s538
        // Predicated region
        $region85: #{tpu_custom_call.1} parent=83 // pred_check
          %p540 = pneg %p86
        $region86: #{tpu_custom_call.1} parent=83 // pred_check_branch
          %542 = sbr.rel (%p540) target = $region88
        $region87: #{tpu_custom_call.1} parent=83 // pred_region
          %543 = dma.done %s536, 128
        $region88: #{tpu_custom_call.1} parent=83 // pred_fallthru
          _
        // Predicated region
        $region89: #{tpu_custom_call.1} parent=83 // pred_check
          %p544 = pneg %p170
        $region90: #{tpu_custom_call.1} parent=83 // pred_check_branch
          %546 = sbr.rel (%p544) target = $region92
        $region91: #{tpu_custom_call.1} parent=83 // pred_region
          %547 = dma.done [#allocation6], 32
        $region92: #{tpu_custom_call.1} parent=83 // pred_fallthru
          _
        %p548 = scmp.lt.s32.totalorder %s39, 1
        %s549 = scalar_select %p548, %s39, 1
        %s550 = smul.addr %s549, 2
        %s551 = smul.addr %s550, 4
        %s552 = scalar_lea.vmem %s0, %s551
        %p553 = pneg %p60
        %p554 = pneg %p57
        %s555 = sand.u32 %s73, 1
        %s556 = scalar_lea.sflag [#allocation3], %s555
        %s557 = sand.u32 %s73, 1
        %s558 = smul.addr %s557, 8
        %s559 = scalar_lea.vmem [#allocation2], %s558
        %p560 = pneg %p86
        %p561 = pneg %p83
        %p562 = pneg %p107
        %p563 = pneg %p104
        %p564 = pneg %p128
        %p565 = pneg %p125
        %p566 = pneg %p149
        %p567 = pneg %p146
        %p568 = pneg %p170
        %p569 = pneg %p167
        %p570 = pneg %p191
        %p571 = pneg %p188
        %p572 = pneg %p212
        %p573 = pneg %p209
        %p574 = pneg %p233
        %p575 = pneg %p230
        %p576 = pneg %p254
        %p577 = pneg %p251
        %p578 = pneg %p275
        %p579 = pneg %p272
        %p580 = pneg %p296
        %p581 = pneg %p293
        %p582 = pneg %p317
        %p583 = pneg %p314
        %p584 = pneg %p338
        %p585 = pneg %p335
        %p586 = pneg %p359
        %p587 = pneg %p356
        %p588 = pneg %p380
        %p589 = pneg %p377
        %p590 = pneg %p406
        %p591 = pneg %p403
        %s592 = sand.u32 %s393, 1
        %s593 = scalar_lea.sflag [#allocation4], %s592
        %s594 = sand.u32 %s393, 1
        %s595 = smul.addr %s594, 8
        %s596 = scalar_lea.vmem [#allocation7], %s595
        %p597 = pneg %p432
        %p598 = pneg %p429
        %s599 = sand.u32 %s419, 1
        %s600 = scalar_lea.sflag [#allocation9], %s599
        %s601 = sand.u32 %s419, 1
        %s602 = smul.addr %s601, 8
        %s603 = scalar_lea.vmem [#allocation8], %s602
        %p604 = scmp.lt.s32.totalorder %s39, 1
        %s605 = scalar_select %p604, %s39, 1
        %s606 = smul.addr %s605, 2
        %s607 = smul.addr %s606, 4
        %s608 = scalar_lea.vmem %s0, %s607
        %v609 = vld [vmem:[%s608] sm:$0xff]
        %v610 = vld [vmem:[%s539] sm:$0xff]
        %v612 = vcombine.high %v609, %v609
        %vm614 = vcmask 1043456
        %v615 = vsel %vm614, %v609, 0.0
        %v616 = vsel %vm614, %v612, 0.0
        %v617 = vadd.f32 %v615, %v616
        %618 = vadd.xlane.f32.xlu0 %v617
        %v619 = vpop.xlane.xlu0 %618
        %v620 = vrcp.pop 256.0
        %v621 = vmul.f32 %v619, %v620
        %v623 = vcombine.high %v610, %v610
        %v625 = vsel %vm614, %v610, 0.0
        %v626 = vsel %vm614, %v623, 0.0
        %v627 = vadd.f32 %v625, %v626
        %628 = vadd.xlane.f32.xlu0 %v627
        %v629 = vpop.xlane.xlu0 %628
        %v630 = vmul.f32 %v629, %v620
        %v631 = vsel %vm614, %v609, -inf
        %v632 = vsel %vm614, %v612, -inf
        %v633 = vmax.f32 %v631, %v632
        %634 = vmax.xlane.f32.xlu0 %v633
        %v635 = vpop.xlane.xlu0 %634
        %v636 = vsel %vm614, %v610, -inf
        %v637 = vsel %vm614, %v623, -inf
        %v638 = vmax.f32 %v636, %v637
        %639 = vmax.xlane.f32.xlu0 %v638
        %v640 = vpop.xlane.xlu0 %639
        %v641 = vld [vmem:[%s7] sm:$0xf]
        %v642 = vmul.f32 %v641, %v621
        %vm643 = vcmask 60416
        %v644 = vsel %vm643, %v642, 0.0
        %v645 = vrot.slane %v644, 4
        %v646 = vadd.f32 %v644, %v645
        %v647 = vrot.slane %v646, 2
        %v648 = vadd.f32 %v646, %v647
        %v649 = vrot.slane %v648, 1
        %v650 = vadd.f32 %v648, %v649
        %v651 = vld [vmem:[%s8] sm:$0xf]
        %v652 = vmul.f32 %v651, %v630
        %v653 = vsel %vm643, %v652, 0.0
        %v654 = vrot.slane %v653, 4
        %v655 = vadd.f32 %v653, %v654
        %v656 = vrot.slane %v655, 2
        %v657 = vadd.f32 %v655, %v656
        %v658 = vrot.slane %v657, 1
        %v659 = vadd.f32 %v657, %v658
        %v660 = vadd.f32 %v650, %v659
        %v661 = vld [vmem:[%s9] sm:$0xf]
        %v662 = vmul.f32 %v661, %v635
        %v663 = vsel %vm643, %v662, 0.0
        %v664 = vrot.slane %v663, 4
        %v665 = vadd.f32 %v663, %v664
        %v666 = vrot.slane %v665, 2
        %v667 = vadd.f32 %v665, %v666
        %v668 = vrot.slane %v667, 1
        %v669 = vadd.f32 %v667, %v668
        %v670 = vadd.f32 %v660, %v669
        %v671 = vld [vmem:[%s10] sm:$0xf]
        %v672 = vmul.f32 %v671, %v640
        %v673 = vsel %vm643, %v672, 0.0
        %v674 = vrot.slane %v673, 4
        %v675 = vadd.f32 %v673, %v674
        %v676 = vrot.slane %v675, 2
        %v677 = vadd.f32 %v675, %v676
        %v678 = vrot.slane %v677, 1
        %v679 = vadd.f32 %v677, %v678
        %v680 = vadd.f32 %v670, %v679
        %v681 = vld [vmem:[%s11] sm:$0x1]
        %v682 = vadd.f32 %v680, %v681
        %v683 = vmax.f32 %v682, 0.0
        %v684 = vld [vmem:[%s12] sm:$0xf]
        %v685 = vlaneseq
        %v686 = vshrl.u32 %v685, 7
        %v687 = vsub.s32 0, %v686
        %v688 = vrot.slane %v683, %v687
        %v689 = vmul.f32 %v684, %v688
        %v690 = vsel %vm643, %v689, 0.0
        %691 = vadd.xlane.f32.xlu0 %v690
        %v692 = vpop.xlane.xlu0 %691
        %v693 = vld [vmem:[%s14] sm:$0xf]
        %v694 = vadd.f32 %v692, %v693
        %v695 = vxor.u32 %v694, 2147483648
        %v696 = vmul.f32 %v695, 1.442695
        %v697 = vpow.pop %v696
        %v698 = vadd.f32 %v697, 1.0
        %v699 = vrcp.pop %v698
        %v700 = vmul.f32 1.0, %v699
        %v701 = vld [vmem:[%s13] sm:$0xf]
        %v702 = vmul.f32 %v701, %v688
        %v703 = vsel %vm643, %v702, 0.0
        %704 = vadd.xlane.f32.xlu0 %v703
        %v705 = vpop.xlane.xlu0 %704
        %v706 = vld [vmem:[%s15] sm:$0xf]
        %v707 = vadd.f32 %v705, %v706
        %v708 = vxor.u32 %v707, 2147483648
        %v709 = vmul.f32 %v708, 1.442695
        %v710 = vpow.pop %v709
        %v711 = vadd.f32 %v710, 1.0
        %v712 = vrcp.pop %v711
        %v713 = vmul.f32 1.0, %v712
        %v714 = vld [vmem:[%s2] sm:$0xf]
        %v715 = vld [vmem:[%s3] sm:$0xf]
        %vm716 = vcmask 31744
        %v718 = vsel %vm716, %v715, 0
        %v720 = vsel %vm614, %v610, 0
        %v722 = vsel %vm614, %v623, 0
        %724 = vmatprep.subr.mxu0 %v722
        %725 = vmatpush1.msra.mxu0 %v720
        %726 = vmatprep.subr.mxu0 0.0
        %727 = vmatpush1.msra.mxu0 0.0
        %728 = vmatprep.subr.mxu0 0.0
        %729 = vmatpush1.msra.mxu0 0.0
        %730 = vmatprep.subr.mxu0 0.0
        %731 = vmatpush1.msra.mxu0 0.0
        %732 = vmatprep.subr.mxu0 0.0
        %733 = vmatpush1.msra.mxu0 0.0
        %734 = vmatprep.subr.mxu0 0.0
        %735 = vmatpush1.msra.mxu0 0.0
        %736 = vmatprep.subr.mxu0 0.0
        %737 = vmatpush1.msra.mxu0 0.0
        %738 = vmatprep.subr.mxu0 0.0
        %739 = vmatpush1.msra.mxu0 0.0
        %740 = vmatprep.subr.mxu0 0.0
        %741 = vmatpush1.msra.mxu0 0.0
        %742 = vmatprep.subr.mxu0 0.0
        %743 = vmatpush1.msra.mxu0 0.0
        %744 = vmatprep.subr.mxu0 0.0
        %745 = vmatpush1.msra.mxu0 0.0
        %746 = vmatprep.subr.mxu0 0.0
        %747 = vmatpush1.msra.mxu0 0.0
        %748 = vmatprep.subr.mxu0 0.0
        %749 = vmatpush1.msra.mxu0 0.0
        %750 = vmatprep.subr.mxu0 0.0
        %751 = vmatpush1.msra.mxu0 0.0
        %752 = vmatprep.subr.mxu0 0.0
        %753 = vmatpush1.msra.mxu0 0.0
        %754 = vmatprep.subr.mxu0 0.0
        %755 = vmatpush1.msra.mxu0 0.0
        %756 = vmatprep.subr.mxu0 0.0
        %757 = vmatpush1.msra.mxu0 0.0
        %758 = vmatprep.subr.mxu0 0.0
        %759 = vmatpush1.msra.mxu0 0.0
        %760 = vmatprep.subr.mxu0 0.0
        %761 = vmatpush1.msra.mxu0 0.0
        %762 = vmatprep.subr.mxu0 0.0
        %763 = vmatpush1.msra.mxu0 0.0
        %764 = vmatprep.subr.mxu0 0.0
        %765 = vmatpush1.msra.mxu0 0.0
        %766 = vmatprep.subr.mxu0 0.0
        %767 = vmatpush1.msra.mxu0 0.0
        %768 = vmatprep.subr.mxu0 0.0
        %769 = vmatpush1.msra.mxu0 0.0
        %770 = vmatprep.subr.mxu0 0.0
        %771 = vmatpush1.msra.mxu0 0.0
        %772 = vmatprep.subr.mxu0 0.0
        %773 = vmatpush1.msra.mxu0 0.0
        %774 = vmatprep.subr.mxu0 0.0
        %775 = vmatpush1.msra.mxu0 0.0
        %776 = vmatprep.subr.mxu0 0.0
        %777 = vmatpush1.msra.mxu0 0.0
        %778 = vmatprep.subr.mxu0 0.0
        %779 = vmatpush1.msra.mxu0 0.0
        %780 = vmatprep.subr.mxu0 0.0
        %781 = vmatpush1.msra.mxu0 0.0
        %782 = vmatprep.subr.mxu0 0.0
        %783 = vmatpush1.msra.mxu0 0.0
        %784 = vmatprep.subr.mxu0 0.0
        %785 = vmatpush1.msra.mxu0 0.0
        %786 = vmatprep.subr.mxu0 0.0
        %787 = vmatpush1.msra.mxu0 0.0
        %788 = vmatprep.mubr.f32.mxu0 0.0
        %789 = vmatmul.mubr.f32.gmra.mrb[0].mxu0 %v718
        %v790 = vpop.f32.mrb[0].mxu0
        %v791 = vadd.f32 0.0, %v790
        %v792 = vpop.f32.mrb[0].mxu0
        %v793 = vadd.f32 0.0, %v792
        %794 = vdwg.mxu0
        %v796 = vsel %vm716, %v714, 0
        %v798 = vsel %vm614, %v609, 0
        %v800 = vsel %vm614, %v612, 0
        %802 = vmatprep.subr.mxu0 %v800
        %803 = vmatpush1.msra.mxu0 %v798
        %804 = vmatprep.subr.mxu0 0.0
        %805 = vmatpush1.msra.mxu0 0.0
        %806 = vmatprep.subr.mxu0 0.0
        %807 = vmatpush1.msra.mxu0 0.0
        %808 = vmatprep.subr.mxu0 0.0
        %809 = vmatpush1.msra.mxu0 0.0
        %810 = vmatprep.subr.mxu0 0.0
        %811 = vmatpush1.msra.mxu0 0.0
        %812 = vmatprep.subr.mxu0 0.0
        %813 = vmatpush1.msra.mxu0 0.0
        %814 = vmatprep.subr.mxu0 0.0
        %815 = vmatpush1.msra.mxu0 0.0
        %816 = vmatprep.subr.mxu0 0.0
        %817 = vmatpush1.msra.mxu0 0.0
        %818 = vmatprep.subr.mxu0 0.0
        %819 = vmatpush1.msra.mxu0 0.0
        %820 = vmatprep.subr.mxu0 0.0
        %821 = vmatpush1.msra.mxu0 0.0
        %822 = vmatprep.subr.mxu0 0.0
        %823 = vmatpush1.msra.mxu0 0.0
        %824 = vmatprep.subr.mxu0 0.0
        %825 = vmatpush1.msra.mxu0 0.0
        %826 = vmatprep.subr.mxu0 0.0
        %827 = vmatpush1.msra.mxu0 0.0
        %828 = vmatprep.subr.mxu0 0.0
        %829 = vmatpush1.msra.mxu0 0.0
        %830 = vmatprep.subr.mxu0 0.0
        %831 = vmatpush1.msra.mxu0 0.0
        %832 = vmatprep.subr.mxu0 0.0
        %833 = vmatpush1.msra.mxu0 0.0
        %834 = vmatprep.subr.mxu0 0.0
        %835 = vmatpush1.msra.mxu0 0.0
        %836 = vmatprep.subr.mxu0 0.0
        %837 = vmatpush1.msra.mxu0 0.0
        %838 = vmatprep.subr.mxu0 0.0
        %839 = vmatpush1.msra.mxu0 0.0
        %840 = vmatprep.subr.mxu0 0.0
        %841 = vmatpush1.msra.mxu0 0.0
        %842 = vmatprep.subr.mxu0 0.0
        %843 = vmatpush1.msra.mxu0 0.0
        %844 = vmatprep.subr.mxu0 0.0
        %845 = vmatpush1.msra.mxu0 0.0
        %846 = vmatprep.subr.mxu0 0.0
        %847 = vmatpush1.msra.mxu0 0.0
        %848 = vmatprep.subr.mxu0 0.0
        %849 = vmatpush1.msra.mxu0 0.0
        %850 = vmatprep.subr.mxu0 0.0
        %851 = vmatpush1.msra.mxu0 0.0
        %852 = vmatprep.subr.mxu0 0.0
        %853 = vmatpush1.msra.mxu0 0.0
        %854 = vmatprep.subr.mxu0 0.0
        %855 = vmatpush1.msra.mxu0 0.0
        %856 = vmatprep.subr.mxu0 0.0
        %857 = vmatpush1.msra.mxu0 0.0
        %858 = vmatprep.subr.mxu0 0.0
        %859 = vmatpush1.msra.mxu0 0.0
        %860 = vmatprep.subr.mxu0 0.0
        %861 = vmatpush1.msra.mxu0 0.0
        %862 = vmatprep.subr.mxu0 0.0
        %863 = vmatpush1.msra.mxu0 0.0
        %864 = vmatprep.subr.mxu0 0.0
        %865 = vmatpush1.msra.mxu0 0.0
        %866 = vmatprep.mubr.f32.mxu0 0.0
        %867 = vmatmul.mubr.f32.gmra.mrb[0].mxu0 %v796
        %v868 = vpop.f32.mrb[0].mxu0
        %v869 = vadd.f32 %v791, %v868
        %v870 = vpop.f32.mrb[0].mxu0
        %v871 = vadd.f32 %v793, %v870
        %872 = vdwg.mxu0
        %v873 = vld [vmem:[%s4] sm:$0xf]
        %875 = vset.pattern.permute.xlu0 0
        %876 = vperm.xlu0 %875, %v873
        %v877 = vpop.permute.xlu0 %876
        %v879 = vadd.f32 %v869, %v877
        %v880 = vadd.f32 %v871, %v877
        %v881 = vmax.f32 %v879, 0.0
        %v882 = vmax.f32 %v880, 0.0
        %v883 = vld [vmem:[#allocation5] sm:$0x3]
        %v884 = vld [vmem:[%s6] sm:$0x3]
        %886 = vset.pattern.permute.xlu0 0
        %887 = vperm.xlu0 %886, %v884
        %v888 = vpop.permute.xlu0 %887
        %v891 = vsel %vm716, %v883, 0
        %v894 = vsel %vm614, %v881, 0
        %v897 = vsel %vm614, %v882, 0
        %899 = vmatprep.subr.mxu0 %v897
        %900 = vmatpush1.msra.mxu0 %v894
        %901 = vmatprep.subr.mxu0 0.0
        %902 = vmatpush1.msra.mxu0 0.0
        %903 = vmatprep.subr.mxu0 0.0
        %904 = vmatpush1.msra.mxu0 0.0
        %905 = vmatprep.subr.mxu0 0.0
        %906 = vmatpush1.msra.mxu0 0.0
        %907 = vmatprep.subr.mxu0 0.0
        %908 = vmatpush1.msra.mxu0 0.0
        %909 = vmatprep.subr.mxu0 0.0
        %910 = vmatpush1.msra.mxu0 0.0
        %911 = vmatprep.subr.mxu0 0.0
        %912 = vmatpush1.msra.mxu0 0.0
        %913 = vmatprep.subr.mxu0 0.0
        %914 = vmatpush1.msra.mxu0 0.0
        %915 = vmatprep.subr.mxu0 0.0
        %916 = vmatpush1.msra.mxu0 0.0
        %917 = vmatprep.subr.mxu0 0.0
        %918 = vmatpush1.msra.mxu0 0.0
        %919 = vmatprep.subr.mxu0 0.0
        %920 = vmatpush1.msra.mxu0 0.0
        %921 = vmatprep.subr.mxu0 0.0
        %922 = vmatpush1.msra.mxu0 0.0
        %923 = vmatprep.subr.mxu0 0.0
        %924 = vmatpush1.msra.mxu0 0.0
        %925 = vmatprep.subr.mxu0 0.0
        %926 = vmatpush1.msra.mxu0 0.0
        %927 = vmatprep.subr.mxu0 0.0
        %928 = vmatpush1.msra.mxu0 0.0
        %929 = vmatprep.subr.mxu0 0.0
        %930 = vmatpush1.msra.mxu0 0.0
        %931 = vmatprep.subr.mxu0 0.0
        %932 = vmatpush1.msra.mxu0 0.0
        %933 = vmatprep.subr.mxu0 0.0
        %934 = vmatpush1.msra.mxu0 0.0
        %935 = vmatprep.subr.mxu0 0.0
        %936 = vmatpush1.msra.mxu0 0.0
        %937 = vmatprep.subr.mxu0 0.0
        %938 = vmatpush1.msra.mxu0 0.0
        %939 = vmatprep.subr.mxu0 0.0
        %940 = vmatpush1.msra.mxu0 0.0
        %941 = vmatprep.subr.mxu0 0.0
        %942 = vmatpush1.msra.mxu0 0.0
        %943 = vmatprep.subr.mxu0 0.0
        %944 = vmatpush1.msra.mxu0 0.0
        %945 = vmatprep.subr.mxu0 0.0
        %946 = vmatpush1.msra.mxu0 0.0
        %947 = vmatprep.subr.mxu0 0.0
        %948 = vmatpush1.msra.mxu0 0.0
        %949 = vmatprep.subr.mxu0 0.0
        %950 = vmatpush1.msra.mxu0 0.0
        %951 = vmatprep.subr.mxu0 0.0
        %952 = vmatpush1.msra.mxu0 0.0
        %953 = vmatprep.subr.mxu0 0.0
        %954 = vmatpush1.msra.mxu0 0.0
        %955 = vmatprep.subr.mxu0 0.0
        %956 = vmatpush1.msra.mxu0 0.0
        %957 = vmatprep.subr.mxu0 0.0
        %958 = vmatpush1.msra.mxu0 0.0
        %959 = vmatprep.subr.mxu0 0.0
        %960 = vmatpush1.msra.mxu0 0.0
        %961 = vmatprep.subr.mxu0 0.0
        %962 = vmatpush1.msra.mxu0 0.0
        %963 = vmatprep.mubr.f32.mxu0 0.0
        %964 = vmatmul.mubr.f32.gmra.mrb[0].mxu0 %v891
        %v965 = vpop.f32.mrb[0].mxu0
        %v966 = vadd.f32 %v888, %v965
        %v967 = vpop.f32.mrb[0].mxu0
        %v968 = vadd.f32 %v888, %v967
        %969 = vdwg.mxu0
        %v970 = vxor.u32 %v966, 2147483648
        %v971 = vxor.u32 %v968, 2147483648
        %v972 = vmul.f32 %v970, 1.442695
        %v973 = vpow.pop %v972
        %v974 = vmul.f32 %v971, 1.442695
        %v975 = vpow.pop %v974
        %v976 = vadd.f32 %v973, 1.0
        %v977 = vadd.f32 %v975, 1.0
        %v978 = vrcp.pop %v976
        %v979 = vmul.f32 1.0, %v978
        %v980 = vrcp.pop %v977
        %v981 = vmul.f32 1.0, %v980
        %v982 = vmul.f32 %v713, 0.5
        %v983 = vmul.f32 %v979, 0.5
        %v984 = vmul.f32 %v981, 0.5
        %986 = vset.pattern.permute.xlu0 0
        %987 = vperm.xlu0 %986, %v982
        %v988 = vpop.permute.xlu0 %987
        %v990 = vlaneseq
        %v991 = vshrl.u32 %v990, 7
        %v992 = vsub.s32 1, %v991
        %v993 = vrot.slane %v983, %v992
        %v994 = vlaneseq
        %v995 = vshrl.u32 %v994, 7
        %v996 = vsub.s32 1, %v995
        %v997 = vrot.slane %v984, %v996
        %v998 = vadd.f32 %v988, %v993
        %v999 = vadd.f32 %v988, %v997
        %v1000 = vmul.f32 %v700, 0.5
        %1002 = vset.pattern.permute.xlu0 0
        %1003 = vperm.xlu0 %1002, %v1000
        %v1004 = vpop.permute.xlu0 %1003
        %v1006 = vlaneseq
        %v1007 = vshrl.u32 %v1006, 7
        %v1008 = vsub.s32 0, %v1007
        %v1009 = vrot.slane %v983, %v1008
        %v1010 = vlaneseq
        %v1011 = vshrl.u32 %v1010, 7
        %v1012 = vsub.s32 0, %v1011
        %v1013 = vrot.slane %v984, %v1012
        %v1014 = vadd.f32 %v1004, %v1009
        %v1015 = vadd.f32 %v1004, %v1013
        %v1018 = vcombine.low %v998, %v999
        %v1020 = vmul.f32 %v610, %v1018
        %v1021 = vadd.f32 %v609, %v1020
        %1022 = vst [vmem:[%s596] sm:$0xff] %v1021
        %v1025 = vcombine.low %v1014, %v1015
        %v1027 = vmul.f32 %v609, %v1025
        %v1028 = vadd.f32 %v610, %v1027
        %1029 = vst [vmem:[%s603] sm:$0xff] %v1028
        %s1030 = sand.u32 %s393, 1
        %s1031 = scalar_lea.sflag [#allocation4], %s1030
        %s1032 = sand.u32 %s393, 1
        %s1033 = smul.addr %s1032, 8
        %s1034 = scalar_lea.vmem [#allocation7], %s1033
        %s1035 = sand.u32 %s419, 1
        %s1036 = scalar_lea.sflag [#allocation9], %s1035
        %s1037 = sand.u32 %s419, 1
        %s1038 = smul.addr %s1037, 8
        %s1039 = scalar_lea.vmem [#allocation8], %s1038
        // Predicated region
        $region93: #{tpu_custom_call.1} parent=83 // pred_check
          %p1040 = pneg %p403
        $region94: #{tpu_custom_call.1} parent=83 // pred_check_branch
          %1042 = sbr.rel (%p1040) target = $region96
        $region95: #{tpu_custom_call.1} parent=83 // pred_region
          %s1044 = ssub.s32 128, 128
          %1045 = vsyncadd %s1031, %s1044
          %s1046 = smul.addr %s39, 2
          %s1047 = smul.addr %s1046, 64
          %s1048 = scalar_lea.hbm %s16, %s1047
          %s1050 = sshll.u32 %s1034, 4
          %s1051 = int_to_ptr.vmem [resolvable:$true] %s1050
          %1053 = dma.vmem_to_hbm [thread:$0]  %s1051, 128, %s1048, %s1031
        $region96: #{tpu_custom_call.1} parent=83 // pred_fallthru
          _
        // Predicated region
        $region97: #{tpu_custom_call.1} parent=83 // pred_check
          %p1054 = pneg %p429
        $region98: #{tpu_custom_call.1} parent=83 // pred_check_branch
          %1056 = sbr.rel (%p1054) target = $region100
        $region99: #{tpu_custom_call.1} parent=83 // pred_region
          %s1058 = ssub.s32 128, 128
          %1059 = vsyncadd %s1036, %s1058
          %s1060 = smul.addr %s39, 2
          %s1061 = smul.addr %s1060, 64
          %s1062 = scalar_lea.hbm %s17, %s1061
          %s1064 = sshll.u32 %s1039, 4
          %s1065 = int_to_ptr.vmem [resolvable:$true] %s1064
          %1067 = dma.vmem_to_hbm [thread:$0]  %s1065, 128, %s1062, %s1036
        $region100: #{tpu_custom_call.1} parent=83 // pred_fallthru
          _
      $region84: #{tpu_custom_call.1} parent=5 // pred_fallthru
        _
      %p1068 = scmp.le.s32.totalorder 2, %s34
      // Predicated region
      $region101: #{tpu_custom_call.1} parent=5 // pred_check
        %p1069 = pneg %p1068
      $region102: #{tpu_custom_call.1} parent=5 // pred_check_branch
        %1071 = sbr.rel (%p1069) target = $region104
      $region103: #{tpu_custom_call.1} parent=5 // pred_region
        %s1072 = ssub.s32 %s34, 2
        // Predicated region
        $region105: #{tpu_custom_call.1} parent=103 // pred_check
          %p1073 = pneg %p409
        $region106: #{tpu_custom_call.1} parent=103 // pred_check_branch
          %1075 = sbr.rel (%p1073) target = $region108
        $region107: #{tpu_custom_call.1} parent=103 // pred_region
          %s1076 = sand.u32 %s394, 1
          %s1077 = scalar_lea.sflag [#allocation4], %s1076
          %s1078 = sand.u32 %s394, 1
          %s1079 = smul.addr %s1078, 8
          %s1080 = scalar_lea.vmem [#allocation7], %s1079
          %1081 = dma.done %s1077, 128
        $region108: #{tpu_custom_call.1} parent=103 // pred_fallthru
          _
        // Predicated region
        $region109: #{tpu_custom_call.1} parent=103 // pred_check
          %p1082 = pneg %p435
        $region110: #{tpu_custom_call.1} parent=103 // pred_check_branch
          %1084 = sbr.rel (%p1082) target = $region112
        $region111: #{tpu_custom_call.1} parent=103 // pred_region
          %s1085 = sand.u32 %s420, 1
          %s1086 = scalar_lea.sflag [#allocation9], %s1085
          %s1087 = sand.u32 %s420, 1
          %s1088 = smul.addr %s1087, 8
          %s1089 = scalar_lea.vmem [#allocation8], %s1088
          %1090 = dma.done %s1086, 128
        $region112: #{tpu_custom_call.1} parent=103 // pred_fallthru
          _
      $region104: #{tpu_custom_call.1} parent=5 // pred_fallthru
        _
    $region6: #{tpu_custom_call.1} parent=1 // loop_footer
      %s38 = sadd.s32 1, %s34
    $region7: #{tpu_custom_call.1} parent=1 // loop_footer_branch
      %33 = sbr.rel target = $region3
    $region8: #{tpu_custom_call.1} parent=1 // loop_exit
      _
    %1091 = vsyncpa [#allocation3], 1
    %s1092 = scalar_lea.sflag [#allocation3], 1
    %1093 = vsyncpa %s1092, 1
    %1094 = vsyncpa [#allocation6], 1
    %1095 = vsyncpa [#allocation4], 1
    %s1096 = scalar_lea.sflag [#allocation4], 1
    %1097 = vsyncpa %s1096, 1
    %1098 = vsyncpa [#allocation9], 1
    %s1099 = scalar_lea.sflag [#allocation9], 1
    %1100 = vsyncpa %s1099, 1

</llo_original>
